<compile_context>
chip_gen: v7x
topology: tpu7x:2x2x1
jax: 0.10.0
libtpu: 0.0.40
codegen_flags: <defaults>
</compile_context>

<pallas_src>
import functools
import math

import numpy as np
import jax
import jax.numpy as jnp
from jax.experimental import pallas as pl
from jax.experimental.pallas import tpu as pltpu


def _factor_linear_kernel(*refs, num_layers, num_res, pool_ks, strided_pool):
    idx = 0
    x_ref = refs[idx]; idx += 1
    hidden = []
    for _ in range(num_layers):
        hidden.append((refs[idx], refs[idx + 1]))
        idx += 2
    wf_ref, bf_ref = refs[idx], refs[idx + 1]; idx += 2
    if strided_pool:
        pool_refs = None
    else:
        pool_refs = refs[idx: idx + num_res]; idx += num_res
    out_refs = refs[idx: idx + num_res]; idx += num_res
    z_scr = refs[idx] if strided_pool else None

    # Shared 1x1-conv MLP: per-row linears on the MXU, ReLU on the VPU.
    h = x_ref[...]                                            # (TM, C_in)
    for w_ref, b_ref in hidden:
        h = jnp.maximum(
            jnp.dot(h, w_ref[...], preferred_element_type=jnp.float32) + b_ref[...],
            0.0)
    z = jnp.dot(h, wf_ref[...], preferred_element_type=jnp.float32) + bf_ref[...]  # (TM, C_out_pad)

    if strided_pool:
        # avg_pool1d: k sublane-strided loads from VMEM + adds (no MXU waste).
        z_scr[...] = z
        tm = z_scr.shape[0]
        for r, k in enumerate(pool_ks):
            if k == 1:
                out_refs[r][...] = z
                continue
            acc = z_scr[pl.ds(0, tm // k, stride=k), :]
            for j in range(1, k):
                acc = acc + z_scr[pl.ds(j, tm // k, stride=k), :]
            out_refs[r][...] = acc * (1.0 / k)
    else:
        # Fallback: block-diagonal pooling matmul (1/k folded into the matrix).
        for r in range(num_res):
            out_refs[r][...] = jnp.dot(pool_refs[r][...], z,
                                       preferred_element_type=jnp.float32)


def factor_layer_linear(xy, xz, yz, params, *, v, rc, feat_dim, resolutions):
    b = xy.shape[0]
    f = feat_dim
    c_in = 2 * v * f
    c_out = rc * f
    c_out_pad = ((c_out + 127) // 128) * 128
    res_tail = list(resolutions[1:])
    ks = [v // r for r in res_tail]
    num_res = len(res_tail)

    hidden_params = params["hidden"]              # list of (W (c_in,c_in), b (c_in,))
    wf, bf = params["final"]                      # (c_in, c_out), (c_out,)
    num_layers = len(hidden_params)

    # ---- pack tri-plane features into lane-dense rows (wrapper = layout only) ----
    # Row order: (direction ss, batch b, spatial pos). Channel order: (v1, s, f),
    # matching einops 'b (v s f) sp'.
    def _pack(p0, p1):          # p0/p1: (B, SP, V1, F)
        st = jnp.stack([p0, p1], axis=3)           # (B, SP, V1, 2, F)
        return st.reshape(b, v, c_in)

    dx = _pack(jnp.transpose(xy, (0, 2, 3, 1)), jnp.transpose(xz, (0, 2, 3, 1)))
    dy = _pack(jnp.transpose(xy, (0, 3, 2, 1)), jnp.transpose(yz, (0, 2, 3, 1)))
    dz = _pack(jnp.transpose(xz, (0, 3, 2, 1)), jnp.transpose(yz, (0, 3, 2, 1)))
    x_rows = jnp.stack([dx, dy, dz], axis=0).reshape(3 * b * v, c_in).astype(jnp.float32)

    m = 3 * b * v
    # Row tile: multiple of V and of 8*k for every pooling kernel (so pooled output
    # blocks stay sublane-aligned and windows never cross a row-tile boundary).
    base = v
    for k in ks:
        base = math.lcm(base, 8 * k)
    row_bytes = 4 * (2 * c_in + c_out_pad)                   # x (double-buffered) + z scratch
    target = max(base, ((6 << 20) // row_bytes) // base * base)
    tm = max(base, (min(m, target, 2048) // base) * base)
    m_pad = pl.cdiv(m, tm) * tm
    if m_pad != m:
        x_rows = jnp.pad(x_rows, ((0, m_pad - m), (0, 0)))

    # Final layer zero-padded to 128 output lanes -> unmasked lane-dense stores.
    wf_pad = jnp.zeros((c_in, c_out_pad), jnp.float32).at[:, :c_out].set(
        wf.astype(jnp.float32))
    bf_pad = jnp.zeros((1, c_out_pad), jnp.float32).at[:, :c_out].set(
        bf.astype(jnp.float32))

    # Inputs / specs shared by both kernel variants.
    base_in_specs = [pl.BlockSpec((tm, c_in), lambda i: (i, 0))]
    base_inputs = [x_rows]
    for (w, bb) in hidden_params:
        base_in_specs += [pl.BlockSpec((c_in, c_in), lambda i: (0, 0)),
                          pl.BlockSpec((1, c_in), lambda i: (0, 0))]
        base_inputs += [w.astype(jnp.float32), bb.reshape(1, c_in).astype(jnp.float32)]
    base_in_specs += [pl.BlockSpec((c_in, c_out_pad), lambda i: (0, 0)),
                      pl.BlockSpec((1, c_out_pad), lambda i: (0, 0))]
    base_inputs += [wf_pad, bf_pad]

    out_specs = [pl.BlockSpec((tm // k, c_out_pad), lambda i: (i, 0)) for k in ks]
    out_shape = [jax.ShapeDtypeStruct((m_pad // k, c_out_pad), jnp.float32) for k in ks]
    cparams = pltpu.CompilerParams(dimension_semantics=("parallel",))

    def _build(strided):
        in_specs = list(base_in_specs)
        inputs = list(base_inputs)
        scratch = []
        if strided:
            scratch = [pltpu.VMEM((tm, c_out_pad), jnp.float32)]
        else:
            for k in ks:
                p = np.zeros((tm // k, tm), np.float32)
                rows = np.arange(tm // k)
                for j in range(k):
                    p[rows, rows * k + j] = 1.0 / k
                in_specs.append(pl.BlockSpec((tm // k, tm), lambda i: (0, 0)))
                inputs.append(jnp.asarray(p))
        kernel = functools.partial(_factor_linear_kernel, num_layers=num_layers,
                                   num_res=num_res, pool_ks=tuple(ks),
                                   strided_pool=strided)
        call = pl.pallas_call(
            kernel,
            grid=(m_pad // tm,),
            in_specs=in_specs,
            out_specs=out_specs,
            out_shape=out_shape,
            scratch_shapes=scratch,
            compiler_params=cparams,
        )
        return call, inputs

    try:
        call, inputs = _build(strided=True)
        pooled = jax.block_until_ready(call(*inputs))
    except Exception:
        # TODO(synk): fallback only used if sublane-strided loads fail to lower here.
        call, inputs = _build(strided=False)
        pooled = call(*inputs)

    # ---- unpack (wrapper layout): rows (s, b, vv), cols (rc, f) -> (B, F, 3*Rc*res) ----
    outs = []
    for r, res in enumerate(res_tail):
        p = pooled[r][:3 * b * res, :c_out].reshape(3, b, res, rc, f)
        p = jnp.transpose(p, (1, 4, 0, 3, 2)).reshape(b, f, 3 * rc * res)
        outs.append(p)
    return outs


def factor_layer_linear_ref(xy, xz, yz, params, *, v, rc, feat_dim, resolutions):
    """Pure-JAX reference mirroring the PyTorch/einops forward."""
    b = xy.shape[0]
    f = feat_dim
    hp = jax.lax.Precision.HIGHEST

    def pack_sv(p0, p1):   # 's b f sp v -> b (v s f) sp'
        st = jnp.stack([p0, p1], axis=0)
        st = jnp.transpose(st, (1, 4, 0, 2, 3))
        return st.reshape(b, 2 * v * f, v)

    def pack_vs(p0, p1):   # 's b f v sp -> b (v s f) sp'
        st = jnp.stack([p0, p1], axis=0)
        st = jnp.transpose(st, (1, 3, 0, 2, 4))
        return st.reshape(b, 2 * v * f, v)

    dx = pack_sv(xy, xz)
    dy = pack_sv(jnp.swapaxes(xy, 2, 3), yz)
    dz = pack_vs(xz, yz)
    h = jnp.concatenate([dx, dy, dz], axis=0)             # (3B, 2VF, V)

    for (w, bb) in params["hidden"]:
        h = jnp.einsum('nip,io->nop', h, w, precision=hp) + bb[None, :, None]
        h = jnp.maximum(h, 0.0)
    wf, bf = params["final"]
    z = jnp.einsum('nip,io->nop', h, wf, precision=hp) + bf[None, :, None]   # (3B, RcF, V)

    zz = z.reshape(3, b, rc, f, v)
    zz = jnp.transpose(zz, (1, 0, 2, 3, 4)).reshape(b, 3 * rc * f, v)        # 'b (s rc f) v'
    outs = []
    for res in resolutions[1:]:
        k = v // res
        pooled = zz.reshape(b, 3 * rc * f, res, k).mean(-1)                  # avg_pool1d
        p = pooled.reshape(b, 3, rc, f, res)
        p = jnp.transpose(p, (0, 3, 1, 2, 4)).reshape(b, f, 3 * rc * res)
        outs.append(p)
    return outs


if __name__ == "__main__":
    B, F, V = 2, 4, 16
    Rc = 2
    feat_dim = F
    resolutions = [16, 8, 4]      # resolutions[1:] -> pooling kernels 2, 4
    num_layers = 2
    c_in = 2 * V * F              # 128
    c_out = Rc * F                # 8

    key = jax.random.PRNGKey(0)
    keys = jax.random.split(key, 3 + 2 * (num_layers + 1))
    xy = jax.random.normal(keys[0], (B, F, V, V), jnp.float32)
    xz = jax.random.normal(keys[1], (B, F, V, V), jnp.float32)
    yz = jax.random.normal(keys[2], (B, F, V, V), jnp.float32)

    scale = 1.0 / np.sqrt(c_in)
    hidden = []
    kk = 3
    for _ in range(num_layers):
        w = jax.random.normal(keys[kk], (c_in, c_in), jnp.float32) * scale; kk += 1
        bb = jax.random.normal(keys[kk], (c_in,), jnp.float32) * 0.1; kk += 1
        hidden.append((w, bb))
    wf = jax.random.normal(keys[kk], (c_in, c_out), jnp.float32) * scale; kk += 1
    bf = jax.random.normal(keys[kk], (c_out,), jnp.float32) * 0.1
    params = {"hidden": hidden, "final": (wf, bf)}

    outs = factor_layer_linear(xy, xz, yz, params, v=V, rc=Rc,
                               feat_dim=feat_dim, resolutions=resolutions)
    outs = jax.block_until_ready(outs)

    refs = factor_layer_linear_ref(xy, xz, yz, params, v=V, rc=Rc,
                                   feat_dim=feat_dim, resolutions=resolutions)
    for o, r in zip(outs, refs):
        np.testing.assert_allclose(np.asarray(o), np.asarray(r),
                                   rtol=1e-2, atol=1e-2)

    print("KERNEL_OK")
</pallas_src>

<mosaic_0001>
module attributes {stable_mosaic.version = 11 : i64} {
  func.func @_factor_linear_kernel(%arg0: i32, %arg1: memref<96x128xf32, #tpu.memory_space<vmem>>, %arg2: memref<128x128xf32, #tpu.memory_space<vmem>>, %arg3: memref<1x128xf32, #tpu.memory_space<vmem>>, %arg4: memref<128x128xf32, #tpu.memory_space<vmem>>, %arg5: memref<1x128xf32, #tpu.memory_space<vmem>>, %arg6: memref<128x128xf32, #tpu.memory_space<vmem>>, %arg7: memref<1x128xf32, #tpu.memory_space<vmem>>, %arg8: memref<48x128xf32, #tpu.memory_space<vmem>>, %arg9: memref<24x128xf32, #tpu.memory_space<vmem>>, %arg10: memref<96x128xf32, #tpu.memory_space<vmem>>) attributes {dimension_semantics = [#tpu.dimension_semantics<parallel>], iteration_bounds = array<i64: 1>, scalar_prefetch = 0 : i64, scratch_operands = 1 : i64, tpu.core_type = #tpu.core_type<tc>, window_params = [{transform_indices = @transform_0, window_bounds = array<i64: 96, 128>}, {pipeline_mode = #tpu.pipeline_mode<synchronous>, transform_indices = @transform_1, window_bounds = array<i64: 128, 128>}, {pipeline_mode = #tpu.pipeline_mode<synchronous>, transform_indices = @transform_2, window_bounds = array<i64: 1, 128>}, {pipeline_mode = #tpu.pipeline_mode<synchronous>, transform_indices = @transform_3, window_bounds = array<i64: 128, 128>}, {pipeline_mode = #tpu.pipeline_mode<synchronous>, transform_indices = @transform_4, window_bounds = array<i64: 1, 128>}, {pipeline_mode = #tpu.pipeline_mode<synchronous>, transform_indices = @transform_5, window_bounds = array<i64: 128, 128>}, {pipeline_mode = #tpu.pipeline_mode<synchronous>, transform_indices = @transform_6, window_bounds = array<i64: 1, 128>}, {transform_indices = @transform_7, window_bounds = array<i64: 48, 128>}, {transform_indices = @transform_8, window_bounds = array<i64: 24, 128>}]} {
    %c0 = arith.constant 0 : index
    %c0_0 = arith.constant 0 : index
    %0 = vector.load %arg1[%c0, %c0_0] : memref<96x128xf32, #tpu.memory_space<vmem>>, vector<96x128xf32>
    %c0_1 = arith.constant 0 : index
    %c0_2 = arith.constant 0 : index
    %1 = vector.load %arg2[%c0_1, %c0_2] : memref<128x128xf32, #tpu.memory_space<vmem>>, vector<128x128xf32>
    %cst = arith.constant dense<0.000000e+00> : vector<96x128xf32>
    %2 = tpu.matmul %0, %1, %cst {dimension_numbers = #tpu.dot_dimension_numbers<[1], [0], [0], [1], [0, 0, 1, 1], [], []>} : vector<96x128xf32>, vector<128x128xf32>, vector<96x128xf32> -> vector<96x128xf32>
    %c0_3 = arith.constant 0 : index
    %c0_4 = arith.constant 0 : index
    %3 = vector.load %arg3[%c0_3, %c0_4] : memref<1x128xf32, #tpu.memory_space<vmem>>, vector<1x128xf32>
    %4 = vector.broadcast %3 : vector<1x128xf32> to vector<96x128xf32>
    %5 = arith.addf %2, %4 : vector<96x128xf32>
    %cst_5 = arith.constant 0.000000e+00 : f32
    %6 = vector.broadcast %cst_5 : f32 to vector<96x128xf32>
    %7 = arith.maximumf %5, %6 : vector<96x128xf32>
    %c0_6 = arith.constant 0 : index
    %c0_7 = arith.constant 0 : index
    %8 = vector.load %arg4[%c0_6, %c0_7] : memref<128x128xf32, #tpu.memory_space<vmem>>, vector<128x128xf32>
    %cst_8 = arith.constant dense<0.000000e+00> : vector<96x128xf32>
    %9 = tpu.matmul %7, %8, %cst_8 {dimension_numbers = #tpu.dot_dimension_numbers<[1], [0], [0], [1], [0, 0, 1, 1], [], []>} : vector<96x128xf32>, vector<128x128xf32>, vector<96x128xf32> -> vector<96x128xf32>
    %c0_9 = arith.constant 0 : index
    %c0_10 = arith.constant 0 : index
    %10 = vector.load %arg5[%c0_9, %c0_10] : memref<1x128xf32, #tpu.memory_space<vmem>>, vector<1x128xf32>
    %11 = vector.broadcast %10 : vector<1x128xf32> to vector<96x128xf32>
    %12 = arith.addf %9, %11 : vector<96x128xf32>
    %cst_11 = arith.constant 0.000000e+00 : f32
    %13 = vector.broadcast %cst_11 : f32 to vector<96x128xf32>
    %14 = arith.maximumf %12, %13 : vector<96x128xf32>
    %c0_12 = arith.constant 0 : index
    %c0_13 = arith.constant 0 : index
    %15 = vector.load %arg6[%c0_12, %c0_13] : memref<128x128xf32, #tpu.memory_space<vmem>>, vector<128x128xf32>
    %cst_14 = arith.constant dense<0.000000e+00> : vector<96x128xf32>
    %16 = tpu.matmul %14, %15, %cst_14 {dimension_numbers = #tpu.dot_dimension_numbers<[1], [0], [0], [1], [0, 0, 1, 1], [], []>} : vector<96x128xf32>, vector<128x128xf32>, vector<96x128xf32> -> vector<96x128xf32>
    %c0_15 = arith.constant 0 : index
    %c0_16 = arith.constant 0 : index
    %17 = vector.load %arg7[%c0_15, %c0_16] : memref<1x128xf32, #tpu.memory_space<vmem>>, vector<1x128xf32>
    %18 = vector.broadcast %17 : vector<1x128xf32> to vector<96x128xf32>
    %19 = arith.addf %16, %18 : vector<96x128xf32>
    %c0_17 = arith.constant 0 : index
    %c0_18 = arith.constant 0 : index
    %20 = vector.load %arg10[%c0_17, %c0_18] : memref<96x128xf32, #tpu.memory_space<vmem>>, vector<96x128xf32>
    tpu.vector_store %arg10[%c0_17, %c0_18], %19 {strides = array<i32>} : memref<96x128xf32, #tpu.memory_space<vmem>>, vector<96x128xf32>,
    %c0_19 = arith.constant 0 : index
    %c0_20 = arith.constant 0 : index
    %21 = tpu.strided_load %arg10[%c0_19, %c0_20] {strides = array<i32: 2, 1>} : memref<96x128xf32, #tpu.memory_space<vmem>>, vector<48x128xf32>
    %c1 = arith.constant 1 : index
    %c0_21 = arith.constant 0 : index
    %22 = tpu.strided_load %arg10[%c1, %c0_21] {strides = array<i32: 2, 1>} : memref<96x128xf32, #tpu.memory_space<vmem>>, vector<48x128xf32>
    %23 = arith.addf %21, %22 : vector<48x128xf32>
    %cst_22 = arith.constant 5.000000e-01 : f32
    %24 = vector.broadcast %cst_22 : f32 to vector<48x128xf32>
    %25 = arith.mulf %23, %24 : vector<48x128xf32>
    %c0_23 = arith.constant 0 : index
    %c0_24 = arith.constant 0 : index
    %26 = vector.load %arg8[%c0_23, %c0_24] : memref<48x128xf32, #tpu.memory_space<vmem>>, vector<48x128xf32>
    tpu.vector_store %arg8[%c0_23, %c0_24], %25 {strides = array<i32>} : memref<48x128xf32, #tpu.memory_space<vmem>>, vector<48x128xf32>,
    %c0_25 = arith.constant 0 : index
    %c0_26 = arith.constant 0 : index
    %27 = tpu.strided_load %arg10[%c0_25, %c0_26] {strides = array<i32: 4, 1>} : memref<96x128xf32, #tpu.memory_space<vmem>>, vector<24x128xf32>
    %c1_27 = arith.constant 1 : index
    %c0_28 = arith.constant 0 : index
    %28 = tpu.strided_load %arg10[%c1_27, %c0_28] {strides = array<i32: 4, 1>} : memref<96x128xf32, #tpu.memory_space<vmem>>, vector<24x128xf32>
    %29 = arith.addf %27, %28 : vector<24x128xf32>
    %c2 = arith.constant 2 : index
    %c0_29 = arith.constant 0 : index
    %30 = tpu.strided_load %arg10[%c2, %c0_29] {strides = array<i32: 4, 1>} : memref<96x128xf32, #tpu.memory_space<vmem>>, vector<24x128xf32>
    %31 = arith.addf %29, %30 : vector<24x128xf32>
    %c3 = arith.constant 3 : index
    %c0_30 = arith.constant 0 : index
    %32 = tpu.strided_load %arg10[%c3, %c0_30] {strides = array<i32: 4, 1>} : memref<96x128xf32, #tpu.memory_space<vmem>>, vector<24x128xf32>
    %33 = arith.addf %31, %32 : vector<24x128xf32>
    %cst_31 = arith.constant 2.500000e-01 : f32
    %34 = vector.broadcast %cst_31 : f32 to vector<24x128xf32>
    %35 = arith.mulf %33, %34 : vector<24x128xf32>
    %c0_32 = arith.constant 0 : index
    %c0_33 = arith.constant 0 : index
    %36 = vector.load %arg9[%c0_32, %c0_33] : memref<24x128xf32, #tpu.memory_space<vmem>>, vector<24x128xf32>
    tpu.vector_store %arg9[%c0_32, %c0_33], %35 {strides = array<i32>} : memref<24x128xf32, #tpu.memory_space<vmem>>, vector<24x128xf32>,
    return
  }
  func.func @transform_0(%arg0: i32) -> (i32, i32) {
    %c0_i32 = arith.constant 0 : i32
    %c0_i32_0 = arith.constant 0 : i32
    return %arg0, %c0_i32 : i32, i32
  }
  func.func @transform_1(%arg0: i32) -> (i32, i32) {
    %c0_i32 = arith.constant 0 : i32
    %c0_i32_0 = arith.constant 0 : i32
    %c0_i32_1 = arith.constant 0 : i32
    return %c0_i32, %c0_i32_0 : i32, i32
  }
  func.func @transform_2(%arg0: i32) -> (i32, i32) {
    %c0_i32 = arith.constant 0 : i32
    %c0_i32_0 = arith.constant 0 : i32
    %c0_i32_1 = arith.constant 0 : i32
    return %c0_i32, %c0_i32_0 : i32, i32
  }
  func.func @transform_3(%arg0: i32) -> (i32, i32) {
    %c0_i32 = arith.constant 0 : i32
    %c0_i32_0 = arith.constant 0 : i32
    %c0_i32_1 = arith.constant 0 : i32
    return %c0_i32, %c0_i32_0 : i32, i32
  }
  func.func @transform_4(%arg0: i32) -> (i32, i32) {
    %c0_i32 = arith.constant 0 : i32
    %c0_i32_0 = arith.constant 0 : i32
    %c0_i32_1 = arith.constant 0 : i32
    return %c0_i32, %c0_i32_0 : i32, i32
  }
  func.func @transform_5(%arg0: i32) -> (i32, i32) {
    %c0_i32 = arith.constant 0 : i32
    %c0_i32_0 = arith.constant 0 : i32
    %c0_i32_1 = arith.constant 0 : i32
    return %c0_i32, %c0_i32_0 : i32, i32
  }
  func.func @transform_6(%arg0: i32) -> (i32, i32) {
    %c0_i32 = arith.constant 0 : i32
    %c0_i32_0 = arith.constant 0 : i32
    %c0_i32_1 = arith.constant 0 : i32
    return %c0_i32, %c0_i32_0 : i32, i32
  }
  func.func @transform_7(%arg0: i32) -> (i32, i32) {
    %c0_i32 = arith.constant 0 : i32
    %c0_i32_0 = arith.constant 0 : i32
    return %arg0, %c0_i32 : i32, i32
  }
  func.func @transform_8(%arg0: i32) -> (i32, i32) {
    %c0_i32 = arith.constant 0 : i32
    %c0_i32_0 = arith.constant 0 : i32
    return %arg0, %c0_i32 : i32, i32
  }
}

module attributes {stable_mosaic.version = 11 : i64} {
  func.func @_factor_linear_kernel(%arg0: i32, %arg1: memref<96x128xf32, #tpu.memory_space<vmem>>, %arg2: memref<128x128xf32, #tpu.memory_space<vmem>>, %arg3: memref<1x128xf32, #tpu.memory_space<vmem>>, %arg4: memref<128x128xf32, #tpu.memory_space<vmem>>, %arg5: memref<1x128xf32, #tpu.memory_space<vmem>>, %arg6: memref<128x128xf32, #tpu.memory_space<vmem>>, %arg7: memref<1x128xf32, #tpu.memory_space<vmem>>, %arg8: memref<48x96xf32, #tpu.memory_space<vmem>>, %arg9: memref<24x96xf32, #tpu.memory_space<vmem>>, %arg10: memref<48x128xf32, #tpu.memory_space<vmem>>, %arg11: memref<24x128xf32, #tpu.memory_space<vmem>>) attributes {dimension_semantics = [#tpu.dimension_semantics<parallel>], iteration_bounds = array<i64: 1>, scalar_prefetch = 0 : i64, scratch_operands = 0 : i64, tpu.core_type = #tpu.core_type<tc>, window_params = [{transform_indices = @transform_0, window_bounds = array<i64: 96, 128>}, {pipeline_mode = #tpu.pipeline_mode<synchronous>, transform_indices = @transform_1, window_bounds = array<i64: 128, 128>}, {pipeline_mode = #tpu.pipeline_mode<synchronous>, transform_indices = @transform_2, window_bounds = array<i64: 1, 128>}, {pipeline_mode = #tpu.pipeline_mode<synchronous>, transform_indices = @transform_3, window_bounds = array<i64: 128, 128>}, {pipeline_mode = #tpu.pipeline_mode<synchronous>, transform_indices = @transform_4, window_bounds = array<i64: 1, 128>}, {pipeline_mode = #tpu.pipeline_mode<synchronous>, transform_indices = @transform_5, window_bounds = array<i64: 128, 128>}, {pipeline_mode = #tpu.pipeline_mode<synchronous>, transform_indices = @transform_6, window_bounds = array<i64: 1, 128>}, {pipeline_mode = #tpu.pipeline_mode<synchronous>, transform_indices = @transform_7, window_bounds = array<i64: 48, 96>}, {pipeline_mode = #tpu.pipeline_mode<synchronous>, transform_indices = @transform_8, window_bounds = array<i64: 24, 96>}, {transform_indices = @transform_9, window_bounds = array<i64: 48, 128>}, {transform_indices = @transform_10, window_bounds = array<i64: 24, 128>}]} {
    %c0 = arith.constant 0 : index
    %c0_0 = arith.constant 0 : index
    %0 = vector.load %arg1[%c0, %c0_0] : memref<96x128xf32, #tpu.memory_space<vmem>>, vector<96x128xf32>
    %c0_1 = arith.constant 0 : index
    %c0_2 = arith.constant 0 : index
    %1 = vector.load %arg2[%c0_1, %c0_2] : memref<128x128xf32, #tpu.memory_space<vmem>>, vector<128x128xf32>
    %cst = arith.constant dense<0.000000e+00> : vector<96x128xf32>
    %2 = tpu.matmul %0, %1, %cst {dimension_numbers = #tpu.dot_dimension_numbers<[1], [0], [0], [1], [0, 0, 1, 1], [], []>} : vector<96x128xf32>, vector<128x128xf32>, vector<96x128xf32> -> vector<96x128xf32>
    %c0_3 = arith.constant 0 : index
    %c0_4 = arith.constant 0 : index
    %3 = vector.load %arg3[%c0_3, %c0_4] : memref<1x128xf32, #tpu.memory_space<vmem>>, vector<1x128xf32>
    %4 = vector.broadcast %3 : vector<1x128xf32> to vector<96x128xf32>
    %5 = arith.addf %2, %4 : vector<96x128xf32>
    %cst_5 = arith.constant 0.000000e+00 : f32
    %6 = vector.broadcast %cst_5 : f32 to vector<96x128xf32>
    %7 = arith.maximumf %5, %6 : vector<96x128xf32>
    %c0_6 = arith.constant 0 : index
    %c0_7 = arith.constant 0 : index
    %8 = vector.load %arg4[%c0_6, %c0_7] : memref<128x128xf32, #tpu.memory_space<vmem>>, vector<128x128xf32>
    %cst_8 = arith.constant dense<0.000000e+00> : vector<96x128xf32>
    %9 = tpu.matmul %7, %8, %cst_8 {dimension_numbers = #tpu.dot_dimension_numbers<[1], [0], [0], [1], [0, 0, 1, 1], [], []>} : vector<96x128xf32>, vector<128x128xf32>, vector<96x128xf32> -> vector<96x128xf32>
    %c0_9 = arith.constant 0 : index
    %c0_10 = arith.constant 0 : index
    %10 = vector.load %arg5[%c0_9, %c0_10] : memref<1x128xf32, #tpu.memory_space<vmem>>, vector<1x128xf32>
    %11 = vector.broadcast %10 : vector<1x128xf32> to vector<96x128xf32>
    %12 = arith.addf %9, %11 : vector<96x128xf32>
    %cst_11 = arith.constant 0.000000e+00 : f32
    %13 = vector.broadcast %cst_11 : f32 to vector<96x128xf32>
    %14 = arith.maximumf %12, %13 : vector<96x128xf32>
    %c0_12 = arith.constant 0 : index
    %c0_13 = arith.constant 0 : index
    %15 = vector.load %arg6[%c0_12, %c0_13] : memref<128x128xf32, #tpu.memory_space<vmem>>, vector<128x128xf32>
    %cst_14 = arith.constant dense<0.000000e+00> : vector<96x128xf32>
    %16 = tpu.matmul %14, %15, %cst_14 {dimension_numbers = #tpu.dot_dimension_numbers<[1], [0], [0], [1], [0, 0, 1, 1], [], []>} : vector<96x128xf32>, vector<128x128xf32>, vector<96x128xf32> -> vector<96x128xf32>
    %c0_15 = arith.constant 0 : index
    %c0_16 = arith.constant 0 : index
    %17 = vector.load %arg7[%c0_15, %c0_16] : memref<1x128xf32, #tpu.memory_space<vmem>>, vector<1x128xf32>
    %18 = vector.broadcast %17 : vector<1x128xf32> to vector<96x128xf32>
    %19 = arith.addf %16, %18 : vector<96x128xf32>
    %c0_17 = arith.constant 0 : index
    %c0_18 = arith.constant 0 : index
    %20 = vector.load %arg8[%c0_17, %c0_18] : memref<48x96xf32, #tpu.memory_space<vmem>>, vector<48x96xf32>
    %cst_19 = arith.constant dense<0.000000e+00> : vector<48x128xf32>
    %21 = tpu.matmul %20, %19, %cst_19 {dimension_numbers = #tpu.dot_dimension_numbers<[1], [0], [0], [1], [0, 0, 1, 1], [], []>} : vector<48x96xf32>, vector<96x128xf32>, vector<48x128xf32> -> vector<48x128xf32>
    %c0_20 = arith.constant 0 : index
    %c0_21 = arith.constant 0 : index
    %22 = vector.load %arg10[%c0_20, %c0_21] : memref<48x128xf32, #tpu.memory_space<vmem>>, vector<48x128xf32>
    tpu.vector_store %arg10[%c0_20, %c0_21], %21 {strides = array<i32>} : memref<48x128xf32, #tpu.memory_space<vmem>>, vector<48x128xf32>,
    %c0_22 = arith.constant 0 : index
    %c0_23 = arith.constant 0 : index
    %23 = vector.load %arg9[%c0_22, %c0_23] : memref<24x96xf32, #tpu.memory_space<vmem>>, vector<24x96xf32>
    %cst_24 = arith.constant dense<0.000000e+00> : vector<24x128xf32>
    %24 = tpu.matmul %23, %19, %cst_24 {dimension_numbers = #tpu.dot_dimension_numbers<[1], [0], [0], [1], [0, 0, 1, 1], [], []>} : vector<24x96xf32>, vector<96x128xf32>, vector<24x128xf32> -> vector<24x128xf32>
    %c0_25 = arith.constant 0 : index
    %c0_26 = arith.constant 0 : index
    %25 = vector.load %arg11[%c0_25, %c0_26] : memref<24x128xf32, #tpu.memory_space<vmem>>, vector<24x128xf32>
    tpu.vector_store %arg11[%c0_25, %c0_26], %24 {strides = array<i32>} : memref<24x128xf32, #tpu.memory_space<vmem>>, vector<24x128xf32>,
    return
  }
  func.func @transform_0(%arg0: i32) -> (i32, i32) {
    %c0_i32 = arith.constant 0 : i32
    %c0_i32_0 = arith.constant 0 : i32
    return %arg0, %c0_i32 : i32, i32
  }
  func.func @transform_1(%arg0: i32) -> (i32, i32) {
    %c0_i32 = arith.constant 0 : i32
    %c0_i32_0 = arith.constant 0 : i32
    %c0_i32_1 = arith.constant 0 : i32
    return %c0_i32, %c0_i32_0 : i32, i32
  }
  func.func @transform_2(%arg0: i32) -> (i32, i32) {
    %c0_i32 = arith.constant 0 : i32
    %c0_i32_0 = arith.constant 0 : i32
    %c0_i32_1 = arith.constant 0 : i32
    return %c0_i32, %c0_i32_0 : i32, i32
  }
  func.func @transform_3(%arg0: i32) -> (i32, i32) {
    %c0_i32 = arith.constant 0 : i32
    %c0_i32_0 = arith.constant 0 : i32
    %c0_i32_1 = arith.constant 0 : i32
    return %c0_i32, %c0_i32_0 : i32, i32
  }
  func.func @transform_4(%arg0: i32) -> (i32, i32) {
    %c0_i32 = arith.constant 0 : i32
    %c0_i32_0 = arith.constant 0 : i32
    %c0_i32_1 = arith.constant 0 : i32
    return %c0_i32, %c0_i32_0 : i32, i32
  }
  func.func @transform_5(%arg0: i32) -> (i32, i32) {
    %c0_i32 = arith.constant 0 : i32
    %c0_i32_0 = arith.constant 0 : i32
    %c0_i32_1 = arith.constant 0 : i32
    return %c0_i32, %c0_i32_0 : i32, i32
  }
  func.func @transform_6(%arg0: i32) -> (i32, i32) {
    %c0_i32 = arith.constant 0 : i32
    %c0_i32_0 = arith.constant 0 : i32
    %c0_i32_1 = arith.constant 0 : i32
    return %c0_i32, %c0_i32_0 : i32, i32
  }
  func.func @transform_7(%arg0: i32) -> (i32, i32) {
    %c0_i32 = arith.constant 0 : i32
    %c0_i32_0 = arith.constant 0 : i32
    %c0_i32_1 = arith.constant 0 : i32
    return %c0_i32, %c0_i32_0 : i32, i32
  }
  func.func @transform_8(%arg0: i32) -> (i32, i32) {
    %c0_i32 = arith.constant 0 : i32
    %c0_i32_0 = arith.constant 0 : i32
    %c0_i32_1 = arith.constant 0 : i32
    return %c0_i32, %c0_i32_0 : i32, i32
  }
  func.func @transform_9(%arg0: i32) -> (i32, i32) {
    %c0_i32 = arith.constant 0 : i32
    %c0_i32_0 = arith.constant 0 : i32
    return %arg0, %c0_i32 : i32, i32
  }
  func.func @transform_10(%arg0: i32) -> (i32, i32) {
    %c0_i32 = arith.constant 0 : i32
    %c0_i32_0 = arith.constant 0 : i32
    return %arg0, %c0_i32 : i32, i32
  }
}

</mosaic_0001>

<llo_original>
// kernel: tpu_custom_call.1
$region0: #{tpu_custom_call.1}
  #allocation0 [shape = 'u32[]', space=smem, size = 0x4, offset = 0x4, fixed_abs, tag = 'smem constant byte address 0x4 - core index']
  #allocation1 [shape = 'u32[144,128]{1,0:T(1,128)}', space=vmem, size = 0x12000, scoped, tag = 'internal scratch']
  #allocation2 [shape = 'f32[96,128]{1,0:T(8,128)}', space=vmem, size = 0xc000, scoped, tag = 'scratch operand']
  %s0 = inlined_call_operand.hbm [shape: f32[96,128], index: 0, kind: input, shape index: {}]
  %s1 = inlined_call_operand.hbm [shape: f32[128,128], index: 1, kind: input, shape index: {}]
  %s2 = inlined_call_operand.vmem [shape: f32[1,128], index: 2, kind: input, shape index: {}]
  %s3 = inlined_call_operand.hbm [shape: f32[128,128], index: 3, kind: input, shape index: {}]
  %s4 = inlined_call_operand.vmem [shape: f32[1,128], index: 4, kind: input, shape index: {}]
  %s5 = inlined_call_operand.hbm [shape: f32[128,128], index: 5, kind: input, shape index: {}]
  %s6 = inlined_call_operand.vmem [shape: f32[1,128], index: 6, kind: input, shape index: {}]
  %s7 = inlined_call_operand.hbm [shape: f32[48,128], index: 7, kind: output, shape index: {0}]
  %s8 = inlined_call_operand.hbm [shape: f32[24,128], index: 8, kind: output, shape index: {1}]
  %9 = xla_tuple %s7, %s8
  %s10 = sld [smem:[#allocation0]]
  $region62: #{tpu_custom_call.1} parent=0
    _
  %s12 = ssub.s32 1, %s10
  %s13 = scalar_select 0, %s12, %s10
  $region1: #{tpu_custom_call.1} parent=0
    #allocation3 [shape = 'u8[49152]{0}', space=vmem, size = 0xc000, scoped, tag = 'input window, operand 0, single buffered']
    #allocation4 [shape = 's32[1]{0}', space=sflag, size = 0x4, scoped, tag = 'scoped memory for tpu_custom_call.1']
    #allocation5 [shape = 's32[1]{0}', space=sflag, size = 0x4, scoped, tag = 'scoped memory for tpu_custom_call.1']
    #allocation6 [shape = 'u8[65536]{0}', space=vmem, size = 0x10000, scoped, tag = 'input window, operand 1, single buffered']
    #allocation7 [shape = 's32[1]{0}', space=sflag, size = 0x4, scoped, tag = 'scoped memory for tpu_custom_call.1']
    #allocation8 [shape = 'u8[65536]{0}', space=vmem, size = 0x10000, scoped, tag = 'input window, operand 3, single buffered']
    #allocation9 [shape = 'u8[65536]{0}', space=vmem, size = 0x10000, scoped, tag = 'input window, operand 5, single buffered']
    #allocation10 [shape = 's32[1]{0}', space=sflag, size = 0x4, scoped, tag = 'scoped memory for tpu_custom_call.1']
    #allocation11 [shape = 'u8[24576]{0}', space=vmem, size = 0x6000, scoped, tag = 'output window, operand 0, single buffered']
    #allocation12 [shape = 'u8[12288]{0}', space=vmem, size = 0x3000, scoped, tag = 'output window, operand 1, single buffered']
    #allocation13 [shape = 's32[1]{0}', space=sflag, size = 0x4, scoped, tag = 'scoped memory for tpu_custom_call.1']
    %14 = vsyncpa [#allocation4], 0
    %15 = vsyncpa [#allocation7], 0
    %16 = vsyncpa [#allocation10], 0
    %17 = vsyncpa [#allocation5], 0
    %18 = vsyncpa [#allocation13], 0
    // Predicated region
    $region2: #{tpu_custom_call.1} parent=1 // pred_check
      _
    $region3: #{tpu_custom_call.1} parent=1 // pred_check_branch
      %20 = sbr.rel (0) target = $region5
    $region4: #{tpu_custom_call.1} parent=1 // pred_region
      %s22 = ssub.s32 1536, 1536
      %23 = vsyncadd [#allocation4], %s22
      %s24 = sshll.u32 [#allocation3], 4
      %s25 = int_to_ptr.vmem [resolvable:$true] %s24
      %30 = dma.hbm_to_vmem [thread:$0]  %s0, 1536, %s25, [#allocation4], 128, 128, 8
    $region5: #{tpu_custom_call.1} parent=1 // pred_fallthru
      _
    // Predicated region
    $region6: #{tpu_custom_call.1} parent=1 // pred_check
      _
    $region7: #{tpu_custom_call.1} parent=1 // pred_check_branch
      %32 = sbr.rel (0) target = $region9
    $region8: #{tpu_custom_call.1} parent=1 // pred_region
      %s34 = ssub.s32 2048, 2048
      %35 = vsyncadd [#allocation7], %s34
      %s36 = sshll.u32 [#allocation6], 4
      %s37 = int_to_ptr.vmem [resolvable:$true] %s36
      %42 = dma.hbm_to_vmem [thread:$0]  %s1, 2048, %s37, [#allocation7], 128, 128, 8
    $region9: #{tpu_custom_call.1} parent=1 // pred_fallthru
      _
    // Predicated region
    $region10: #{tpu_custom_call.1} parent=1 // pred_check
      _
    $region11: #{tpu_custom_call.1} parent=1 // pred_check_branch
      %44 = sbr.rel (0) target = $region13
    $region12: #{tpu_custom_call.1} parent=1 // pred_region
      _
    $region13: #{tpu_custom_call.1} parent=1 // pred_fallthru
      _
    // Predicated region
    $region14: #{tpu_custom_call.1} parent=1 // pred_check
      _
    $region15: #{tpu_custom_call.1} parent=1 // pred_check_branch
      %46 = sbr.rel (0) target = $region17
    $region16: #{tpu_custom_call.1} parent=1 // pred_region
      %s48 = ssub.s32 2048, 2048
      %49 = vsyncadd [#allocation7], %s48
      %s50 = sshll.u32 [#allocation8], 4
      %s51 = int_to_ptr.vmem [resolvable:$true] %s50
      %56 = dma.hbm_to_vmem [thread:$0]  %s3, 2048, %s51, [#allocation7], 128, 128, 8
    $region17: #{tpu_custom_call.1} parent=1 // pred_fallthru
      _
    // Predicated region
    $region18: #{tpu_custom_call.1} parent=1 // pred_check
      _
    $region19: #{tpu_custom_call.1} parent=1 // pred_check_branch
      %58 = sbr.rel (0) target = $region21
    $region20: #{tpu_custom_call.1} parent=1 // pred_region
      _
    $region21: #{tpu_custom_call.1} parent=1 // pred_fallthru
      _
    // Predicated region
    $region22: #{tpu_custom_call.1} parent=1 // pred_check
      _
    $region23: #{tpu_custom_call.1} parent=1 // pred_check_branch
      %60 = sbr.rel (0) target = $region25
    $region24: #{tpu_custom_call.1} parent=1 // pred_region
      %s62 = ssub.s32 2048, 2048
      %63 = vsyncadd [#allocation10], %s62
      %s64 = sshll.u32 [#allocation9], 4
      %s65 = int_to_ptr.vmem [resolvable:$true] %s64
      %70 = dma.hbm_to_vmem [thread:$0]  %s5, 2048, %s65, [#allocation10], 128, 128, 8
    $region25: #{tpu_custom_call.1} parent=1 // pred_fallthru
      _
    // Predicated region
    $region26: #{tpu_custom_call.1} parent=1 // pred_check
      _
    $region27: #{tpu_custom_call.1} parent=1 // pred_check_branch
      %72 = sbr.rel (0) target = $region29
    $region28: #{tpu_custom_call.1} parent=1 // pred_region
      _
    $region29: #{tpu_custom_call.1} parent=1 // pred_fallthru
      _
    // Predicated region
    $region30: #{tpu_custom_call.1} parent=1 // pred_check
      _
    $region31: #{tpu_custom_call.1} parent=1 // pred_check_branch
      %74 = sbr.rel (0) target = $region33
    $region32: #{tpu_custom_call.1} parent=1 // pred_region
      %75 = dma.done [#allocation4], 1536
    $region33: #{tpu_custom_call.1} parent=1 // pred_fallthru
      _
    // Predicated region
    $region34: #{tpu_custom_call.1} parent=1 // pred_check
      _
    $region35: #{tpu_custom_call.1} parent=1 // pred_check_branch
      %77 = sbr.rel (0) target = $region37
    $region36: #{tpu_custom_call.1} parent=1 // pred_region
      %78 = dma.done [#allocation7], 2048
    $region37: #{tpu_custom_call.1} parent=1 // pred_fallthru
      _
    // Predicated region
    $region38: #{tpu_custom_call.1} parent=1 // pred_check
      _
    $region39: #{tpu_custom_call.1} parent=1 // pred_check_branch
      %80 = sbr.rel (0) target = $region41
    $region40: #{tpu_custom_call.1} parent=1 // pred_region
      %81 = dma.done [#allocation7], 2048
    $region41: #{tpu_custom_call.1} parent=1 // pred_fallthru
      _
    // Predicated region
    $region42: #{tpu_custom_call.1} parent=1 // pred_check
      _
    $region43: #{tpu_custom_call.1} parent=1 // pred_check_branch
      %83 = sbr.rel (0) target = $region45
    $region44: #{tpu_custom_call.1} parent=1 // pred_region
      %84 = dma.done [#allocation10], 2048
    $region45: #{tpu_custom_call.1} parent=1 // pred_fallthru
      _
    %v85 = vld [vmem:[#allocation3] sm:$0xff]
    %v86 = vld [vmem:[#allocation3 + $0x8] sm:$0xff]
    %v87 = vld [vmem:[#allocation3 + $0x10] sm:$0xff]
    %v88 = vld [vmem:[#allocation3 + $0x18] sm:$0xff]
    %v89 = vld [vmem:[#allocation3 + $0x20] sm:$0xff]
    %v90 = vld [vmem:[#allocation3 + $0x28] sm:$0xff]
    %v91 = vld [vmem:[#allocation3 + $0x30] sm:$0xff]
    %v92 = vld [vmem:[#allocation3 + $0x38] sm:$0xff]
    %v93 = vld [vmem:[#allocation3 + $0x40] sm:$0xff]
    %v94 = vld [vmem:[#allocation3 + $0x48] sm:$0xff]
    %v95 = vld [vmem:[#allocation3 + $0x50] sm:$0xff]
    %v96 = vld [vmem:[#allocation3 + $0x58] sm:$0xff]
    %v97 = vld [vmem:[#allocation6] sm:$0xff]
    %v98 = vld [vmem:[#allocation6 + $0x8] sm:$0xff]
    %v99 = vld [vmem:[#allocation6 + $0x10] sm:$0xff]
    %v100 = vld [vmem:[#allocation6 + $0x18] sm:$0xff]
    %v101 = vld [vmem:[#allocation6 + $0x20] sm:$0xff]
    %v102 = vld [vmem:[#allocation6 + $0x28] sm:$0xff]
    %v103 = vld [vmem:[#allocation6 + $0x30] sm:$0xff]
    %v104 = vld [vmem:[#allocation6 + $0x38] sm:$0xff]
    %v105 = vld [vmem:[#allocation6 + $0x40] sm:$0xff]
    %v106 = vld [vmem:[#allocation6 + $0x48] sm:$0xff]
    %v107 = vld [vmem:[#allocation6 + $0x50] sm:$0xff]
    %v108 = vld [vmem:[#allocation6 + $0x58] sm:$0xff]
    %v109 = vld [vmem:[#allocation6 + $0x60] sm:$0xff]
    %v110 = vld [vmem:[#allocation6 + $0x68] sm:$0xff]
    %v111 = vld [vmem:[#allocation6 + $0x70] sm:$0xff]
    %v112 = vld [vmem:[#allocation6 + $0x78] sm:$0xff]
    %v113 = vld [vmem:[%s2] sm:$0x1]
    %v115 = vlaneseq
    %v116 = vshrl.u32 %v115, 7
    %v117 = vsub.s32 0, %v116
    %v118 = vrot.slane %v113, %v117
    %120 = vmatprep.subr.mxu0 0.0
    %121 = vmatpush1.msra.mxu0 %v97
    %122 = vmatprep.subr.mxu0 0.0
    %123 = vmatpush1.msra.mxu0 %v98
    %124 = vmatprep.subr.mxu0 0.0
    %125 = vmatpush1.msra.mxu0 %v99
    %126 = vmatprep.subr.mxu0 0.0
    %127 = vmatpush1.msra.mxu0 %v100
    %128 = vmatprep.subr.mxu0 0.0
    %129 = vmatpush1.msra.mxu0 %v101
    %130 = vmatprep.subr.mxu0 0.0
    %131 = vmatpush1.msra.mxu0 %v102
    %132 = vmatprep.subr.mxu0 0.0
    %133 = vmatpush1.msra.mxu0 %v103
    %134 = vmatprep.subr.mxu0 0.0
    %135 = vmatpush1.msra.mxu0 %v104
    %136 = vmatprep.subr.mxu0 0.0
    %137 = vmatpush1.msra.mxu0 %v105
    %138 = vmatprep.subr.mxu0 0.0
    %139 = vmatpush1.msra.mxu0 %v106
    %140 = vmatprep.subr.mxu0 0.0
    %141 = vmatpush1.msra.mxu0 %v107
    %142 = vmatprep.subr.mxu0 0.0
    %143 = vmatpush1.msra.mxu0 %v108
    %144 = vmatprep.subr.mxu0 0.0
    %145 = vmatpush1.msra.mxu0 %v109
    %146 = vmatprep.subr.mxu0 0.0
    %147 = vmatpush1.msra.mxu0 %v110
    %148 = vmatprep.subr.mxu0 0.0
    %149 = vmatpush1.msra.mxu0 %v111
    %150 = vmatprep.subr.mxu0 0.0
    %151 = vmatpush1.msra.mxu0 %v112
    %152 = vmatprep.subr.mxu0 0.0
    %153 = vmatpush1.msra.mxu0 0.0
    %154 = vmatprep.subr.mxu0 0.0
    %155 = vmatpush1.msra.mxu0 0.0
    %156 = vmatprep.subr.mxu0 0.0
    %157 = vmatpush1.msra.mxu0 0.0
    %158 = vmatprep.subr.mxu0 0.0
    %159 = vmatpush1.msra.mxu0 0.0
    %160 = vmatprep.subr.mxu0 0.0
    %161 = vmatpush1.msra.mxu0 0.0
    %162 = vmatprep.subr.mxu0 0.0
    %163 = vmatpush1.msra.mxu0 0.0
    %164 = vmatprep.subr.mxu0 0.0
    %165 = vmatpush1.msra.mxu0 0.0
    %166 = vmatprep.subr.mxu0 0.0
    %167 = vmatpush1.msra.mxu0 0.0
    %168 = vmatprep.subr.mxu0 0.0
    %169 = vmatpush1.msra.mxu0 0.0
    %170 = vmatprep.subr.mxu0 0.0
    %171 = vmatpush1.msra.mxu0 0.0
    %172 = vmatprep.subr.mxu0 0.0
    %173 = vmatpush1.msra.mxu0 0.0
    %174 = vmatprep.subr.mxu0 0.0
    %175 = vmatpush1.msra.mxu0 0.0
    %176 = vmatprep.subr.mxu0 0.0
    %177 = vmatpush1.msra.mxu0 0.0
    %178 = vmatprep.subr.mxu0 0.0
    %179 = vmatpush1.msra.mxu0 0.0
    %180 = vmatprep.subr.mxu0 0.0
    %181 = vmatpush1.msra.mxu0 0.0
    %182 = vmatprep.subr.mxu0 0.0
    %183 = vmatpush1.msra.mxu0 0.0
    %184 = vmatprep.mubr.f32.mxu0 0.0
    %185 = vmatmul.mubr.f32.gmra.mrb[0].mxu0 %v85
    %v186 = vpop.f32.mrb[0].mxu0
    %v187 = vadd.f32 %v118, %v186
    %v188 = vpop.f32.mrb[0].mxu0
    %189 = vmatprep.mubr.f32.mxu0 0.0
    %190 = vmatmul.mubr.f32.gmra.mrb[0].mxu0 %v86
    %v191 = vpop.f32.mrb[0].mxu0
    %v192 = vadd.f32 %v118, %v191
    %v193 = vpop.f32.mrb[0].mxu0
    %194 = vmatprep.mubr.f32.mxu0 0.0
    %195 = vmatmul.mubr.f32.gmra.mrb[0].mxu0 %v87
    %v196 = vpop.f32.mrb[0].mxu0
    %v197 = vadd.f32 %v118, %v196
    %v198 = vpop.f32.mrb[0].mxu0
    %199 = vmatprep.mubr.f32.mxu0 0.0
    %200 = vmatmul.mubr.f32.gmra.mrb[0].mxu0 %v88
    %v201 = vpop.f32.mrb[0].mxu0
    %v202 = vadd.f32 %v118, %v201
    %v203 = vpop.f32.mrb[0].mxu0
    %204 = vmatprep.mubr.f32.mxu0 0.0
    %205 = vmatmul.mubr.f32.gmra.mrb[0].mxu0 %v89
    %v206 = vpop.f32.mrb[0].mxu0
    %v207 = vadd.f32 %v118, %v206
    %v208 = vpop.f32.mrb[0].mxu0
    %209 = vmatprep.mubr.f32.mxu0 0.0
    %210 = vmatmul.mubr.f32.gmra.mrb[0].mxu0 %v90
    %v211 = vpop.f32.mrb[0].mxu0
    %v212 = vadd.f32 %v118, %v211
    %v213 = vpop.f32.mrb[0].mxu0
    %214 = vmatprep.mubr.f32.mxu0 0.0
    %215 = vmatmul.mubr.f32.gmra.mrb[0].mxu0 %v91
    %v216 = vpop.f32.mrb[0].mxu0
    %v217 = vadd.f32 %v118, %v216
    %v218 = vpop.f32.mrb[0].mxu0
    %219 = vmatprep.mubr.f32.mxu0 0.0
    %220 = vmatmul.mubr.f32.gmra.mrb[0].mxu0 %v92
    %v221 = vpop.f32.mrb[0].mxu0
    %v222 = vadd.f32 %v118, %v221
    %v223 = vpop.f32.mrb[0].mxu0
    %224 = vmatprep.mubr.f32.mxu0 0.0
    %225 = vmatmul.mubr.f32.gmra.mrb[0].mxu0 %v93
    %v226 = vpop.f32.mrb[0].mxu0
    %v227 = vadd.f32 %v118, %v226
    %v228 = vpop.f32.mrb[0].mxu0
    %229 = vmatprep.mubr.f32.mxu0 0.0
    %230 = vmatmul.mubr.f32.gmra.mrb[0].mxu0 %v94
    %v231 = vpop.f32.mrb[0].mxu0
    %v232 = vadd.f32 %v118, %v231
    %v233 = vpop.f32.mrb[0].mxu0
    %234 = vmatprep.mubr.f32.mxu0 0.0
    %235 = vmatmul.mubr.f32.gmra.mrb[0].mxu0 %v95
    %v236 = vpop.f32.mrb[0].mxu0
    %v237 = vadd.f32 %v118, %v236
    %v238 = vpop.f32.mrb[0].mxu0
    %239 = vmatprep.mubr.f32.mxu0 0.0
    %240 = vmatmul.mubr.f32.gmra.mrb[0].mxu0 %v96
    %v241 = vpop.f32.mrb[0].mxu0
    %v242 = vadd.f32 %v118, %v241
    %v243 = vpop.f32.mrb[0].mxu0
    %244 = vdwg.mxu0
    %v245 = vmax.f32 %v187, 0.0
    %v246 = vmax.f32 %v192, 0.0
    %v247 = vmax.f32 %v197, 0.0
    %v248 = vmax.f32 %v202, 0.0
    %v249 = vmax.f32 %v207, 0.0
    %v250 = vmax.f32 %v212, 0.0
    %v251 = vmax.f32 %v217, 0.0
    %v252 = vmax.f32 %v222, 0.0
    %v253 = vmax.f32 %v227, 0.0
    %v254 = vmax.f32 %v232, 0.0
    %v255 = vmax.f32 %v237, 0.0
    %v256 = vmax.f32 %v242, 0.0
    %v257 = vld [vmem:[#allocation8] sm:$0xff]
    %v258 = vld [vmem:[#allocation8 + $0x8] sm:$0xff]
    %v259 = vld [vmem:[#allocation8 + $0x10] sm:$0xff]
    %v260 = vld [vmem:[#allocation8 + $0x18] sm:$0xff]
    %v261 = vld [vmem:[#allocation8 + $0x20] sm:$0xff]
    %v262 = vld [vmem:[#allocation8 + $0x28] sm:$0xff]
    %v263 = vld [vmem:[#allocation8 + $0x30] sm:$0xff]
    %v264 = vld [vmem:[#allocation8 + $0x38] sm:$0xff]
    %v265 = vld [vmem:[#allocation8 + $0x40] sm:$0xff]
    %v266 = vld [vmem:[#allocation8 + $0x48] sm:$0xff]
    %v267 = vld [vmem:[#allocation8 + $0x50] sm:$0xff]
    %v268 = vld [vmem:[#allocation8 + $0x58] sm:$0xff]
    %v269 = vld [vmem:[#allocation8 + $0x60] sm:$0xff]
    %v270 = vld [vmem:[#allocation8 + $0x68] sm:$0xff]
    %v271 = vld [vmem:[#allocation8 + $0x70] sm:$0xff]
    %v272 = vld [vmem:[#allocation8 + $0x78] sm:$0xff]
    %v273 = vld [vmem:[%s4] sm:$0x1]
    %v275 = vlaneseq
    %v276 = vshrl.u32 %v275, 7
    %v277 = vsub.s32 0, %v276
    %v278 = vrot.slane %v273, %v277
    %280 = vmatprep.subr.mxu0 0.0
    %281 = vmatpush1.msra.mxu0 %v257
    %282 = vmatprep.subr.mxu0 0.0
    %283 = vmatpush1.msra.mxu0 %v258
    %284 = vmatprep.subr.mxu0 0.0
    %285 = vmatpush1.msra.mxu0 %v259
    %286 = vmatprep.subr.mxu0 0.0
    %287 = vmatpush1.msra.mxu0 %v260
    %288 = vmatprep.subr.mxu0 0.0
    %289 = vmatpush1.msra.mxu0 %v261
    %290 = vmatprep.subr.mxu0 0.0
    %291 = vmatpush1.msra.mxu0 %v262
    %292 = vmatprep.subr.mxu0 0.0
    %293 = vmatpush1.msra.mxu0 %v263
    %294 = vmatprep.subr.mxu0 0.0
    %295 = vmatpush1.msra.mxu0 %v264
    %296 = vmatprep.subr.mxu0 0.0
    %297 = vmatpush1.msra.mxu0 %v265
    %298 = vmatprep.subr.mxu0 0.0
    %299 = vmatpush1.msra.mxu0 %v266
    %300 = vmatprep.subr.mxu0 0.0
    %301 = vmatpush1.msra.mxu0 %v267
    %302 = vmatprep.subr.mxu0 0.0
    %303 = vmatpush1.msra.mxu0 %v268
    %304 = vmatprep.subr.mxu0 0.0
    %305 = vmatpush1.msra.mxu0 %v269
    %306 = vmatprep.subr.mxu0 0.0
    %307 = vmatpush1.msra.mxu0 %v270
    %308 = vmatprep.subr.mxu0 0.0
    %309 = vmatpush1.msra.mxu0 %v271
    %310 = vmatprep.subr.mxu0 0.0
    %311 = vmatpush1.msra.mxu0 %v272
    %312 = vmatprep.subr.mxu0 0.0
    %313 = vmatpush1.msra.mxu0 0.0
    %314 = vmatprep.subr.mxu0 0.0
    %315 = vmatpush1.msra.mxu0 0.0
    %316 = vmatprep.subr.mxu0 0.0
    %317 = vmatpush1.msra.mxu0 0.0
    %318 = vmatprep.subr.mxu0 0.0
    %319 = vmatpush1.msra.mxu0 0.0
    %320 = vmatprep.subr.mxu0 0.0
    %321 = vmatpush1.msra.mxu0 0.0
    %322 = vmatprep.subr.mxu0 0.0
    %323 = vmatpush1.msra.mxu0 0.0
    %324 = vmatprep.subr.mxu0 0.0
    %325 = vmatpush1.msra.mxu0 0.0
    %326 = vmatprep.subr.mxu0 0.0
    %327 = vmatpush1.msra.mxu0 0.0
    %328 = vmatprep.subr.mxu0 0.0
    %329 = vmatpush1.msra.mxu0 0.0
    %330 = vmatprep.subr.mxu0 0.0
    %331 = vmatpush1.msra.mxu0 0.0
    %332 = vmatprep.subr.mxu0 0.0
    %333 = vmatpush1.msra.mxu0 0.0
    %334 = vmatprep.subr.mxu0 0.0
    %335 = vmatpush1.msra.mxu0 0.0
    %336 = vmatprep.subr.mxu0 0.0
    %337 = vmatpush1.msra.mxu0 0.0
    %338 = vmatprep.subr.mxu0 0.0
    %339 = vmatpush1.msra.mxu0 0.0
    %340 = vmatprep.subr.mxu0 0.0
    %341 = vmatpush1.msra.mxu0 0.0
    %342 = vmatprep.subr.mxu0 0.0
    %343 = vmatpush1.msra.mxu0 0.0
    %344 = vmatprep.mubr.f32.mxu0 0.0
    %345 = vmatmul.mubr.f32.gmra.mrb[0].mxu0 %v245
    %v346 = vpop.f32.mrb[0].mxu0
    %v347 = vadd.f32 %v278, %v346
    %v348 = vpop.f32.mrb[0].mxu0
    %349 = vmatprep.mubr.f32.mxu0 0.0
    %350 = vmatmul.mubr.f32.gmra.mrb[0].mxu0 %v246
    %v351 = vpop.f32.mrb[0].mxu0
    %v352 = vadd.f32 %v278, %v351
    %v353 = vpop.f32.mrb[0].mxu0
    %354 = vmatprep.mubr.f32.mxu0 0.0
    %355 = vmatmul.mubr.f32.gmra.mrb[0].mxu0 %v247
    %v356 = vpop.f32.mrb[0].mxu0
    %v357 = vadd.f32 %v278, %v356
    %v358 = vpop.f32.mrb[0].mxu0
    %359 = vmatprep.mubr.f32.mxu0 0.0
    %360 = vmatmul.mubr.f32.gmra.mrb[0].mxu0 %v248
    %v361 = vpop.f32.mrb[0].mxu0
    %v362 = vadd.f32 %v278, %v361
    %v363 = vpop.f32.mrb[0].mxu0
    %364 = vmatprep.mubr.f32.mxu0 0.0
    %365 = vmatmul.mubr.f32.gmra.mrb[0].mxu0 %v249
    %v366 = vpop.f32.mrb[0].mxu0
    %v367 = vadd.f32 %v278, %v366
    %v368 = vpop.f32.mrb[0].mxu0
    %369 = vmatprep.mubr.f32.mxu0 0.0
    %370 = vmatmul.mubr.f32.gmra.mrb[0].mxu0 %v250
    %v371 = vpop.f32.mrb[0].mxu0
    %v372 = vadd.f32 %v278, %v371
    %v373 = vpop.f32.mrb[0].mxu0
    %374 = vmatprep.mubr.f32.mxu0 0.0
    %375 = vmatmul.mubr.f32.gmra.mrb[0].mxu0 %v251
    %v376 = vpop.f32.mrb[0].mxu0
    %v377 = vadd.f32 %v278, %v376
    %v378 = vpop.f32.mrb[0].mxu0
    %379 = vmatprep.mubr.f32.mxu0 0.0
    %380 = vmatmul.mubr.f32.gmra.mrb[0].mxu0 %v252
    %v381 = vpop.f32.mrb[0].mxu0
    %v382 = vadd.f32 %v278, %v381
    %v383 = vpop.f32.mrb[0].mxu0
    %384 = vmatprep.mubr.f32.mxu0 0.0
    %385 = vmatmul.mubr.f32.gmra.mrb[0].mxu0 %v253
    %v386 = vpop.f32.mrb[0].mxu0
    %v387 = vadd.f32 %v278, %v386
    %v388 = vpop.f32.mrb[0].mxu0
    %389 = vmatprep.mubr.f32.mxu0 0.0
    %390 = vmatmul.mubr.f32.gmra.mrb[0].mxu0 %v254
    %v391 = vpop.f32.mrb[0].mxu0
    %v392 = vadd.f32 %v278, %v391
    %v393 = vpop.f32.mrb[0].mxu0
    %394 = vmatprep.mubr.f32.mxu0 0.0
    %395 = vmatmul.mubr.f32.gmra.mrb[0].mxu0 %v255
    %v396 = vpop.f32.mrb[0].mxu0
    %v397 = vadd.f32 %v278, %v396
    %v398 = vpop.f32.mrb[0].mxu0
    %399 = vmatprep.mubr.f32.mxu0 0.0
    %400 = vmatmul.mubr.f32.gmra.mrb[0].mxu0 %v256
    %v401 = vpop.f32.mrb[0].mxu0
    %v402 = vadd.f32 %v278, %v401
    %v403 = vpop.f32.mrb[0].mxu0
    %404 = vdwg.mxu0
    %v405 = vmax.f32 %v347, 0.0
    %v406 = vmax.f32 %v352, 0.0
    %v407 = vmax.f32 %v357, 0.0
    %v408 = vmax.f32 %v362, 0.0
    %v409 = vmax.f32 %v367, 0.0
    %v410 = vmax.f32 %v372, 0.0
    %v411 = vmax.f32 %v377, 0.0
    %v412 = vmax.f32 %v382, 0.0
    %v413 = vmax.f32 %v387, 0.0
    %v414 = vmax.f32 %v392, 0.0
    %v415 = vmax.f32 %v397, 0.0
    %v416 = vmax.f32 %v402, 0.0
    %v417 = vld [vmem:[#allocation9] sm:$0xff]
    %v418 = vld [vmem:[#allocation9 + $0x8] sm:$0xff]
    %v419 = vld [vmem:[#allocation9 + $0x10] sm:$0xff]
    %v420 = vld [vmem:[#allocation9 + $0x18] sm:$0xff]
    %v421 = vld [vmem:[#allocation9 + $0x20] sm:$0xff]
    %v422 = vld [vmem:[#allocation9 + $0x28] sm:$0xff]
    %v423 = vld [vmem:[#allocation9 + $0x30] sm:$0xff]
    %v424 = vld [vmem:[#allocation9 + $0x38] sm:$0xff]
    %v425 = vld [vmem:[#allocation9 + $0x40] sm:$0xff]
    %v426 = vld [vmem:[#allocation9 + $0x48] sm:$0xff]
    %v427 = vld [vmem:[#allocation9 + $0x50] sm:$0xff]
    %v428 = vld [vmem:[#allocation9 + $0x58] sm:$0xff]
    %v429 = vld [vmem:[#allocation9 + $0x60] sm:$0xff]
    %v430 = vld [vmem:[#allocation9 + $0x68] sm:$0xff]
    %v431 = vld [vmem:[#allocation9 + $0x70] sm:$0xff]
    %v432 = vld [vmem:[#allocation9 + $0x78] sm:$0xff]
    %v433 = vld [vmem:[%s6] sm:$0x1]
    %v435 = vlaneseq
    %v436 = vshrl.u32 %v435, 7
    %v437 = vsub.s32 0, %v436
    %v438 = vrot.slane %v433, %v437
    %440 = vmatprep.subr.mxu0 0.0
    %441 = vmatpush1.msra.mxu0 %v417
    %442 = vmatprep.subr.mxu0 0.0
    %443 = vmatpush1.msra.mxu0 %v418
    %444 = vmatprep.subr.mxu0 0.0
    %445 = vmatpush1.msra.mxu0 %v419
    %446 = vmatprep.subr.mxu0 0.0
    %447 = vmatpush1.msra.mxu0 %v420
    %448 = vmatprep.subr.mxu0 0.0
    %449 = vmatpush1.msra.mxu0 %v421
    %450 = vmatprep.subr.mxu0 0.0
    %451 = vmatpush1.msra.mxu0 %v422
    %452 = vmatprep.subr.mxu0 0.0
    %453 = vmatpush1.msra.mxu0 %v423
    %454 = vmatprep.subr.mxu0 0.0
    %455 = vmatpush1.msra.mxu0 %v424
    %456 = vmatprep.subr.mxu0 0.0
    %457 = vmatpush1.msra.mxu0 %v425
    %458 = vmatprep.subr.mxu0 0.0
    %459 = vmatpush1.msra.mxu0 %v426
    %460 = vmatprep.subr.mxu0 0.0
    %461 = vmatpush1.msra.mxu0 %v427
    %462 = vmatprep.subr.mxu0 0.0
    %463 = vmatpush1.msra.mxu0 %v428
    %464 = vmatprep.subr.mxu0 0.0
    %465 = vmatpush1.msra.mxu0 %v429
    %466 = vmatprep.subr.mxu0 0.0
    %467 = vmatpush1.msra.mxu0 %v430
    %468 = vmatprep.subr.mxu0 0.0
    %469 = vmatpush1.msra.mxu0 %v431
    %470 = vmatprep.subr.mxu0 0.0
    %471 = vmatpush1.msra.mxu0 %v432
    %472 = vmatprep.subr.mxu0 0.0
    %473 = vmatpush1.msra.mxu0 0.0
    %474 = vmatprep.subr.mxu0 0.0
    %475 = vmatpush1.msra.mxu0 0.0
    %476 = vmatprep.subr.mxu0 0.0
    %477 = vmatpush1.msra.mxu0 0.0
    %478 = vmatprep.subr.mxu0 0.0
    %479 = vmatpush1.msra.mxu0 0.0
    %480 = vmatprep.subr.mxu0 0.0
    %481 = vmatpush1.msra.mxu0 0.0
    %482 = vmatprep.subr.mxu0 0.0
    %483 = vmatpush1.msra.mxu0 0.0
    %484 = vmatprep.subr.mxu0 0.0
    %485 = vmatpush1.msra.mxu0 0.0
    %486 = vmatprep.subr.mxu0 0.0
    %487 = vmatpush1.msra.mxu0 0.0
    %488 = vmatprep.subr.mxu0 0.0
    %489 = vmatpush1.msra.mxu0 0.0
    %490 = vmatprep.subr.mxu0 0.0
    %491 = vmatpush1.msra.mxu0 0.0
    %492 = vmatprep.subr.mxu0 0.0
    %493 = vmatpush1.msra.mxu0 0.0
    %494 = vmatprep.subr.mxu0 0.0
    %495 = vmatpush1.msra.mxu0 0.0
    %496 = vmatprep.subr.mxu0 0.0
    %497 = vmatpush1.msra.mxu0 0.0
    %498 = vmatprep.subr.mxu0 0.0
    %499 = vmatpush1.msra.mxu0 0.0
    %500 = vmatprep.subr.mxu0 0.0
    %501 = vmatpush1.msra.mxu0 0.0
    %502 = vmatprep.subr.mxu0 0.0
    %503 = vmatpush1.msra.mxu0 0.0
    %504 = vmatprep.mubr.f32.mxu0 0.0
    %505 = vmatmul.mubr.f32.gmra.mrb[0].mxu0 %v405
    %v506 = vpop.f32.mrb[0].mxu0
    %v507 = vadd.f32 %v438, %v506
    %v508 = vpop.f32.mrb[0].mxu0
    %509 = vmatprep.mubr.f32.mxu0 0.0
    %510 = vmatmul.mubr.f32.gmra.mrb[0].mxu0 %v406
    %v511 = vpop.f32.mrb[0].mxu0
    %v512 = vadd.f32 %v438, %v511
    %v513 = vpop.f32.mrb[0].mxu0
    %514 = vmatprep.mubr.f32.mxu0 0.0
    %515 = vmatmul.mubr.f32.gmra.mrb[0].mxu0 %v407
    %v516 = vpop.f32.mrb[0].mxu0
    %v517 = vadd.f32 %v438, %v516
    %v518 = vpop.f32.mrb[0].mxu0
    %519 = vmatprep.mubr.f32.mxu0 0.0
    %520 = vmatmul.mubr.f32.gmra.mrb[0].mxu0 %v408
    %v521 = vpop.f32.mrb[0].mxu0
    %v522 = vadd.f32 %v438, %v521
    %v523 = vpop.f32.mrb[0].mxu0
    %524 = vmatprep.mubr.f32.mxu0 0.0
    %525 = vmatmul.mubr.f32.gmra.mrb[0].mxu0 %v409
    %v526 = vpop.f32.mrb[0].mxu0
    %v527 = vadd.f32 %v438, %v526
    %v528 = vpop.f32.mrb[0].mxu0
    %529 = vmatprep.mubr.f32.mxu0 0.0
    %530 = vmatmul.mubr.f32.gmra.mrb[0].mxu0 %v410
    %v531 = vpop.f32.mrb[0].mxu0
    %v532 = vadd.f32 %v438, %v531
    %v533 = vpop.f32.mrb[0].mxu0
    %534 = vmatprep.mubr.f32.mxu0 0.0
    %535 = vmatmul.mubr.f32.gmra.mrb[0].mxu0 %v411
    %v536 = vpop.f32.mrb[0].mxu0
    %v537 = vadd.f32 %v438, %v536
    %v538 = vpop.f32.mrb[0].mxu0
    %539 = vmatprep.mubr.f32.mxu0 0.0
    %540 = vmatmul.mubr.f32.gmra.mrb[0].mxu0 %v412
    %v541 = vpop.f32.mrb[0].mxu0
    %v542 = vadd.f32 %v438, %v541
    %v543 = vpop.f32.mrb[0].mxu0
    %544 = vmatprep.mubr.f32.mxu0 0.0
    %545 = vmatmul.mubr.f32.gmra.mrb[0].mxu0 %v413
    %v546 = vpop.f32.mrb[0].mxu0
    %v547 = vadd.f32 %v438, %v546
    %v548 = vpop.f32.mrb[0].mxu0
    %549 = vmatprep.mubr.f32.mxu0 0.0
    %550 = vmatmul.mubr.f32.gmra.mrb[0].mxu0 %v414
    %v551 = vpop.f32.mrb[0].mxu0
    %v552 = vadd.f32 %v438, %v551
    %v553 = vpop.f32.mrb[0].mxu0
    %554 = vmatprep.mubr.f32.mxu0 0.0
    %555 = vmatmul.mubr.f32.gmra.mrb[0].mxu0 %v415
    %v556 = vpop.f32.mrb[0].mxu0
    %v557 = vadd.f32 %v438, %v556
    %v558 = vpop.f32.mrb[0].mxu0
    %559 = vmatprep.mubr.f32.mxu0 0.0
    %560 = vmatmul.mubr.f32.gmra.mrb[0].mxu0 %v416
    %v561 = vpop.f32.mrb[0].mxu0
    %v562 = vadd.f32 %v438, %v561
    %v563 = vpop.f32.mrb[0].mxu0
    %564 = vdwg.mxu0
    %565 = vst [vmem:[#allocation2] sm:$0xff] %v507
    %566 = vst [vmem:[#allocation2 + $0x8] sm:$0xff] %v512
    %567 = vst [vmem:[#allocation2 + $0x10] sm:$0xff] %v517
    %568 = vst [vmem:[#allocation2 + $0x18] sm:$0xff] %v522
    %569 = vst [vmem:[#allocation2 + $0x20] sm:$0xff] %v527
    %570 = vst [vmem:[#allocation2 + $0x28] sm:$0xff] %v532
    %571 = vst [vmem:[#allocation2 + $0x30] sm:$0xff] %v537
    %572 = vst [vmem:[#allocation2 + $0x38] sm:$0xff] %v542
    %573 = vst [vmem:[#allocation2 + $0x40] sm:$0xff] %v547
    %574 = vst [vmem:[#allocation2 + $0x48] sm:$0xff] %v552
    %575 = vst [vmem:[#allocation2 + $0x50] sm:$0xff] %v557
    %576 = vst [vmem:[#allocation2 + $0x58] sm:$0xff] %v562
    %v577 = vld [vmem:[#allocation2] ss:$2 sm:$0xff]
    %s578 = scalar_lea.vmem [#allocation2], 16
    %v579 = vld [vmem:[%s578] ss:$2 sm:$0xff]
    %s580 = scalar_lea.vmem [#allocation2], 32
    %v581 = vld [vmem:[%s580] ss:$2 sm:$0xff]
    %s582 = scalar_lea.vmem [#allocation2], 48
    %v583 = vld [vmem:[%s582] ss:$2 sm:$0xff]
    %s584 = scalar_lea.vmem [#allocation2], 64
    %v585 = vld [vmem:[%s584] ss:$2 sm:$0xff]
    %s586 = scalar_lea.vmem [#allocation2], 80
    %v587 = vld [vmem:[%s586] ss:$2 sm:$0xff]
    %s588 = scalar_lea.vmem [#allocation2], 1
    %v589 = vld [vmem:[%s588] ss:$2 sm:$0xff]
    %s590 = scalar_lea.vmem [#allocation2], 17
    %v591 = vld [vmem:[%s590] ss:$2 sm:$0xff]
    %s592 = scalar_lea.vmem [#allocation2], 33
    %v593 = vld [vmem:[%s592] ss:$2 sm:$0xff]
    %s594 = scalar_lea.vmem [#allocation2], 49
    %v595 = vld [vmem:[%s594] ss:$2 sm:$0xff]
    %s596 = scalar_lea.vmem [#allocation2], 65
    %v597 = vld [vmem:[%s596] ss:$2 sm:$0xff]
    %s598 = scalar_lea.vmem [#allocation2], 81
    %v599 = vld [vmem:[%s598] ss:$2 sm:$0xff]
    %v600 = vadd.f32 %v577, %v589
    %v601 = vadd.f32 %v579, %v591
    %v602 = vadd.f32 %v581, %v593
    %v603 = vadd.f32 %v583, %v595
    %v604 = vadd.f32 %v585, %v597
    %v605 = vadd.f32 %v587, %v599
    %v606 = vmul.f32 %v600, 0.5
    %v607 = vmul.f32 %v601, 0.5
    %v608 = vmul.f32 %v602, 0.5
    %v609 = vmul.f32 %v603, 0.5
    %v610 = vmul.f32 %v604, 0.5
    %v611 = vmul.f32 %v605, 0.5
    %612 = vst [vmem:[#allocation11] sm:$0xff] %v606
    %613 = vst [vmem:[#allocation11 + $0x8] sm:$0xff] %v607
    %614 = vst [vmem:[#allocation11 + $0x10] sm:$0xff] %v608
    %615 = vst [vmem:[#allocation11 + $0x18] sm:$0xff] %v609
    %616 = vst [vmem:[#allocation11 + $0x20] sm:$0xff] %v610
    %617 = vst [vmem:[#allocation11 + $0x28] sm:$0xff] %v611
    %v618 = vld [vmem:[#allocation2] ss:$4 sm:$0xff]
    %v619 = vld [vmem:[%s580] ss:$4 sm:$0xff]
    %v620 = vld [vmem:[%s584] ss:$4 sm:$0xff]
    %v621 = vld [vmem:[%s588] ss:$4 sm:$0xff]
    %v622 = vld [vmem:[%s592] ss:$4 sm:$0xff]
    %v623 = vld [vmem:[%s596] ss:$4 sm:$0xff]
    %v624 = vadd.f32 %v618, %v621
    %v625 = vadd.f32 %v619, %v622
    %v626 = vadd.f32 %v620, %v623
    %s627 = scalar_lea.vmem [#allocation2], 2
    %v628 = vld [vmem:[%s627] ss:$4 sm:$0xff]
    %s629 = scalar_lea.vmem [#allocation2], 34
    %v630 = vld [vmem:[%s629] ss:$4 sm:$0xff]
    %s631 = scalar_lea.vmem [#allocation2], 66
    %v632 = vld [vmem:[%s631] ss:$4 sm:$0xff]
    %v633 = vadd.f32 %v624, %v628
    %v634 = vadd.f32 %v625, %v630
    %v635 = vadd.f32 %v626, %v632
    %s636 = scalar_lea.vmem [#allocation2], 3
    %v637 = vld [vmem:[%s636] ss:$4 sm:$0xff]
    %s638 = scalar_lea.vmem [#allocation2], 35
    %v639 = vld [vmem:[%s638] ss:$4 sm:$0xff]
    %s640 = scalar_lea.vmem [#allocation2], 67
    %v641 = vld [vmem:[%s640] ss:$4 sm:$0xff]
    %v642 = vadd.f32 %v633, %v637
    %v643 = vadd.f32 %v634, %v639
    %v644 = vadd.f32 %v635, %v641
    %v645 = vmul.f32 %v642, 0.25
    %v646 = vmul.f32 %v643, 0.25
    %v647 = vmul.f32 %v644, 0.25
    %648 = vst [vmem:[#allocation12] sm:$0xff] %v645
    %649 = vst [vmem:[#allocation12 + $0x8] sm:$0xff] %v646
    %650 = vst [vmem:[#allocation12 + $0x10] sm:$0xff] %v647
    // Predicated region
    $region46: #{tpu_custom_call.1} parent=1 // pred_check
      _
    $region47: #{tpu_custom_call.1} parent=1 // pred_check_branch
      %652 = sbr.rel (0) target = $region49
    $region48: #{tpu_custom_call.1} parent=1 // pred_region
      %s654 = ssub.s32 768, 768
      %655 = vsyncadd [#allocation5], %s654
      %s656 = sshll.u32 [#allocation11], 4
      %s657 = int_to_ptr.vmem [resolvable:$true] %s656
      %662 = dma.vmem_to_hbm [thread:$0]  %s657, 768, %s7, [#allocation5], 128, 128, 8
    $region49: #{tpu_custom_call.1} parent=1 // pred_fallthru
      _
    // Predicated region
    $region50: #{tpu_custom_call.1} parent=1 // pred_check
      _
    $region51: #{tpu_custom_call.1} parent=1 // pred_check_branch
      %664 = sbr.rel (0) target = $region53
    $region52: #{tpu_custom_call.1} parent=1 // pred_region
      %s666 = ssub.s32 384, 384
      %667 = vsyncadd [#allocation13], %s666
      %s668 = sshll.u32 [#allocation12], 4
      %s669 = int_to_ptr.vmem [resolvable:$true] %s668
      %674 = dma.vmem_to_hbm [thread:$0]  %s669, 384, %s8, [#allocation13], 128, 128, 8
    $region53: #{tpu_custom_call.1} parent=1 // pred_fallthru
      _
    // Predicated region
    $region54: #{tpu_custom_call.1} parent=1 // pred_check
      _
    $region55: #{tpu_custom_call.1} parent=1 // pred_check_branch
      %676 = sbr.rel (0) target = $region57
    $region56: #{tpu_custom_call.1} parent=1 // pred_region
      %677 = dma.done [#allocation5], 768
    $region57: #{tpu_custom_call.1} parent=1 // pred_fallthru
      _
    // Predicated region
    $region58: #{tpu_custom_call.1} parent=1 // pred_check
      _
    $region59: #{tpu_custom_call.1} parent=1 // pred_check_branch
      %679 = sbr.rel (0) target = $region61
    $region60: #{tpu_custom_call.1} parent=1 // pred_region
      %680 = dma.done [#allocation13], 384
    $region61: #{tpu_custom_call.1} parent=1 // pred_fallthru
      _
    %681 = vsyncpa [#allocation4], 1
    %682 = vsyncpa [#allocation7], 1
    %683 = vsyncpa [#allocation10], 1
    %684 = vsyncpa [#allocation5], 1
    %685 = vsyncpa [#allocation13], 1

// kernel: tpu_custom_call.1
$region0: #{tpu_custom_call.1}
  #allocation0 [shape = 'u32[]', space=smem, size = 0x4, offset = 0x4, fixed_abs, tag = 'smem constant byte address 0x4 - core index']
  #allocation1 [shape = 'u32[144,128]{1,0:T(1,128)}', space=vmem, size = 0x12000, scoped, tag = 'internal scratch']
  %s0 = inlined_call_operand.hbm [shape: f32[96,128], index: 0, kind: input, shape index: {}]
  %s1 = inlined_call_operand.hbm [shape: f32[128,128], index: 1, kind: input, shape index: {}]
  %s2 = inlined_call_operand.vmem [shape: f32[1,128], index: 2, kind: input, shape index: {}]
  %s3 = inlined_call_operand.hbm [shape: f32[128,128], index: 3, kind: input, shape index: {}]
  %s4 = inlined_call_operand.vmem [shape: f32[1,128], index: 4, kind: input, shape index: {}]
  %s5 = inlined_call_operand.hbm [shape: f32[128,128], index: 5, kind: input, shape index: {}]
  %s6 = inlined_call_operand.vmem [shape: f32[1,128], index: 6, kind: input, shape index: {}]
  %s7 = inlined_call_operand.hbm [shape: f32[48,96], index: 7, kind: input, shape index: {}]
  %s8 = inlined_call_operand.vmem [shape: f32[24,96], index: 8, kind: input, shape index: {}]
  %s9 = inlined_call_operand.hbm [shape: f32[48,128], index: 9, kind: output, shape index: {0}]
  %s10 = inlined_call_operand.hbm [shape: f32[24,128], index: 10, kind: output, shape index: {1}]
  %11 = xla_tuple %s9, %s10
  %s12 = sld [smem:[#allocation0]]
  $region74: #{tpu_custom_call.1} parent=0
    _
  %s14 = ssub.s32 1, %s12
  %s15 = scalar_select 0, %s14, %s12
  $region1: #{tpu_custom_call.1} parent=0
    #allocation2 [shape = 'u8[49152]{0}', space=vmem, size = 0xc000, scoped, tag = 'input window, operand 0, single buffered']
    #allocation3 [shape = 's32[1]{0}', space=sflag, size = 0x4, scoped, tag = 'scoped memory for tpu_custom_call.1']
    #allocation4 [shape = 's32[1]{0}', space=sflag, size = 0x4, scoped, tag = 'scoped memory for tpu_custom_call.1']
    #allocation5 [shape = 'u8[65536]{0}', space=vmem, size = 0x10000, scoped, tag = 'input window, operand 1, single buffered']
    #allocation6 [shape = 's32[1]{0}', space=sflag, size = 0x4, scoped, tag = 'scoped memory for tpu_custom_call.1']
    #allocation7 [shape = 'u8[65536]{0}', space=vmem, size = 0x10000, scoped, tag = 'input window, operand 3, single buffered']
    #allocation8 [shape = 'u8[65536]{0}', space=vmem, size = 0x10000, scoped, tag = 'input window, operand 5, single buffered']
    #allocation9 [shape = 's32[1]{0}', space=sflag, size = 0x4, scoped, tag = 'scoped memory for tpu_custom_call.1']
    #allocation10 [shape = 'u8[24576]{0}', space=vmem, size = 0x6000, scoped, tag = 'input window, operand 7, single buffered']
    #allocation11 [shape = 'u8[24576]{0}', space=vmem, size = 0x6000, scoped, tag = 'output window, operand 0, single buffered']
    #allocation12 [shape = 'u8[12288]{0}', space=vmem, size = 0x3000, scoped, tag = 'output window, operand 1, single buffered']
    #allocation13 [shape = 's32[1]{0}', space=sflag, size = 0x4, scoped, tag = 'scoped memory for tpu_custom_call.1']
    %16 = vsyncpa [#allocation3], 0
    %17 = vsyncpa [#allocation6], 0
    %18 = vsyncpa [#allocation9], 0
    %19 = vsyncpa [#allocation4], 0
    %20 = vsyncpa [#allocation13], 0
    // Predicated region
    $region2: #{tpu_custom_call.1} parent=1 // pred_check
      _
    $region3: #{tpu_custom_call.1} parent=1 // pred_check_branch
      %22 = sbr.rel (0) target = $region5
    $region4: #{tpu_custom_call.1} parent=1 // pred_region
      %s24 = ssub.s32 1536, 1536
      %25 = vsyncadd [#allocation3], %s24
      %s26 = sshll.u32 [#allocation2], 4
      %s27 = int_to_ptr.vmem [resolvable:$true] %s26
      %32 = dma.hbm_to_vmem [thread:$0]  %s0, 1536, %s27, [#allocation3], 128, 128, 8
    $region5: #{tpu_custom_call.1} parent=1 // pred_fallthru
      _
    // Predicated region
    $region6: #{tpu_custom_call.1} parent=1 // pred_check
      _
    $region7: #{tpu_custom_call.1} parent=1 // pred_check_branch
      %34 = sbr.rel (0) target = $region9
    $region8: #{tpu_custom_call.1} parent=1 // pred_region
      %s36 = ssub.s32 2048, 2048
      %37 = vsyncadd [#allocation6], %s36
      %s38 = sshll.u32 [#allocation5], 4
      %s39 = int_to_ptr.vmem [resolvable:$true] %s38
      %44 = dma.hbm_to_vmem [thread:$0]  %s1, 2048, %s39, [#allocation6], 128, 128, 8
    $region9: #{tpu_custom_call.1} parent=1 // pred_fallthru
      _
    // Predicated region
    $region10: #{tpu_custom_call.1} parent=1 // pred_check
      _
    $region11: #{tpu_custom_call.1} parent=1 // pred_check_branch
      %46 = sbr.rel (0) target = $region13
    $region12: #{tpu_custom_call.1} parent=1 // pred_region
      _
    $region13: #{tpu_custom_call.1} parent=1 // pred_fallthru
      _
    // Predicated region
    $region14: #{tpu_custom_call.1} parent=1 // pred_check
      _
    $region15: #{tpu_custom_call.1} parent=1 // pred_check_branch
      %48 = sbr.rel (0) target = $region17
    $region16: #{tpu_custom_call.1} parent=1 // pred_region
      %s50 = ssub.s32 2048, 2048
      %51 = vsyncadd [#allocation6], %s50
      %s52 = sshll.u32 [#allocation7], 4
      %s53 = int_to_ptr.vmem [resolvable:$true] %s52
      %58 = dma.hbm_to_vmem [thread:$0]  %s3, 2048, %s53, [#allocation6], 128, 128, 8
    $region17: #{tpu_custom_call.1} parent=1 // pred_fallthru
      _
    // Predicated region
    $region18: #{tpu_custom_call.1} parent=1 // pred_check
      _
    $region19: #{tpu_custom_call.1} parent=1 // pred_check_branch
      %60 = sbr.rel (0) target = $region21
    $region20: #{tpu_custom_call.1} parent=1 // pred_region
      _
    $region21: #{tpu_custom_call.1} parent=1 // pred_fallthru
      _
    // Predicated region
    $region22: #{tpu_custom_call.1} parent=1 // pred_check
      _
    $region23: #{tpu_custom_call.1} parent=1 // pred_check_branch
      %62 = sbr.rel (0) target = $region25
    $region24: #{tpu_custom_call.1} parent=1 // pred_region
      %s64 = ssub.s32 2048, 2048
      %65 = vsyncadd [#allocation9], %s64
      %s66 = sshll.u32 [#allocation8], 4
      %s67 = int_to_ptr.vmem [resolvable:$true] %s66
      %72 = dma.hbm_to_vmem [thread:$0]  %s5, 2048, %s67, [#allocation9], 128, 128, 8
    $region25: #{tpu_custom_call.1} parent=1 // pred_fallthru
      _
    // Predicated region
    $region26: #{tpu_custom_call.1} parent=1 // pred_check
      _
    $region27: #{tpu_custom_call.1} parent=1 // pred_check_branch
      %74 = sbr.rel (0) target = $region29
    $region28: #{tpu_custom_call.1} parent=1 // pred_region
      _
    $region29: #{tpu_custom_call.1} parent=1 // pred_fallthru
      _
    // Predicated region
    $region30: #{tpu_custom_call.1} parent=1 // pred_check
      _
    $region31: #{tpu_custom_call.1} parent=1 // pred_check_branch
      %76 = sbr.rel (0) target = $region33
    $region32: #{tpu_custom_call.1} parent=1 // pred_region
      %s78 = ssub.s32 768, 768
      %79 = vsyncadd [#allocation9], %s78
      %s80 = sshll.u32 [#allocation10], 4
      %s81 = int_to_ptr.vmem [resolvable:$true] %s80
      %86 = dma.hbm_to_vmem [thread:$0]  %s7, 768, %s81, [#allocation9], 128, 128, 8
    $region33: #{tpu_custom_call.1} parent=1 // pred_fallthru
      _
    // Predicated region
    $region34: #{tpu_custom_call.1} parent=1 // pred_check
      _
    $region35: #{tpu_custom_call.1} parent=1 // pred_check_branch
      %88 = sbr.rel (0) target = $region37
    $region36: #{tpu_custom_call.1} parent=1 // pred_region
      _
    $region37: #{tpu_custom_call.1} parent=1 // pred_fallthru
      _
    // Predicated region
    $region38: #{tpu_custom_call.1} parent=1 // pred_check
      _
    $region39: #{tpu_custom_call.1} parent=1 // pred_check_branch
      %90 = sbr.rel (0) target = $region41
    $region40: #{tpu_custom_call.1} parent=1 // pred_region
      %91 = dma.done [#allocation3], 1536
    $region41: #{tpu_custom_call.1} parent=1 // pred_fallthru
      _
    // Predicated region
    $region42: #{tpu_custom_call.1} parent=1 // pred_check
      _
    $region43: #{tpu_custom_call.1} parent=1 // pred_check_branch
      %93 = sbr.rel (0) target = $region45
    $region44: #{tpu_custom_call.1} parent=1 // pred_region
      %94 = dma.done [#allocation6], 2048
    $region45: #{tpu_custom_call.1} parent=1 // pred_fallthru
      _
    // Predicated region
    $region46: #{tpu_custom_call.1} parent=1 // pred_check
      _
    $region47: #{tpu_custom_call.1} parent=1 // pred_check_branch
      %96 = sbr.rel (0) target = $region49
    $region48: #{tpu_custom_call.1} parent=1 // pred_region
      %97 = dma.done [#allocation6], 2048
    $region49: #{tpu_custom_call.1} parent=1 // pred_fallthru
      _
    // Predicated region
    $region50: #{tpu_custom_call.1} parent=1 // pred_check
      _
    $region51: #{tpu_custom_call.1} parent=1 // pred_check_branch
      %99 = sbr.rel (0) target = $region53
    $region52: #{tpu_custom_call.1} parent=1 // pred_region
      %100 = dma.done [#allocation9], 2048
    $region53: #{tpu_custom_call.1} parent=1 // pred_fallthru
      _
    // Predicated region
    $region54: #{tpu_custom_call.1} parent=1 // pred_check
      _
    $region55: #{tpu_custom_call.1} parent=1 // pred_check_branch
      %102 = sbr.rel (0) target = $region57
    $region56: #{tpu_custom_call.1} parent=1 // pred_region
      %103 = dma.done [#allocation9], 768
    $region57: #{tpu_custom_call.1} parent=1 // pred_fallthru
      _
    %v104 = vld [vmem:[#allocation2] sm:$0xff]
    %v105 = vld [vmem:[#allocation2 + $0x8] sm:$0xff]
    %v106 = vld [vmem:[#allocation2 + $0x10] sm:$0xff]
    %v107 = vld [vmem:[#allocation2 + $0x18] sm:$0xff]
    %v108 = vld [vmem:[#allocation2 + $0x20] sm:$0xff]
    %v109 = vld [vmem:[#allocation2 + $0x28] sm:$0xff]
    %v110 = vld [vmem:[#allocation2 + $0x30] sm:$0xff]
    %v111 = vld [vmem:[#allocation2 + $0x38] sm:$0xff]
    %v112 = vld [vmem:[#allocation2 + $0x40] sm:$0xff]
    %v113 = vld [vmem:[#allocation2 + $0x48] sm:$0xff]
    %v114 = vld [vmem:[#allocation2 + $0x50] sm:$0xff]
    %v115 = vld [vmem:[#allocation2 + $0x58] sm:$0xff]
    %v116 = vld [vmem:[#allocation5] sm:$0xff]
    %v117 = vld [vmem:[#allocation5 + $0x8] sm:$0xff]
    %v118 = vld [vmem:[#allocation5 + $0x10] sm:$0xff]
    %v119 = vld [vmem:[#allocation5 + $0x18] sm:$0xff]
    %v120 = vld [vmem:[#allocation5 + $0x20] sm:$0xff]
    %v121 = vld [vmem:[#allocation5 + $0x28] sm:$0xff]
    %v122 = vld [vmem:[#allocation5 + $0x30] sm:$0xff]
    %v123 = vld [vmem:[#allocation5 + $0x38] sm:$0xff]
    %v124 = vld [vmem:[#allocation5 + $0x40] sm:$0xff]
    %v125 = vld [vmem:[#allocation5 + $0x48] sm:$0xff]
    %v126 = vld [vmem:[#allocation5 + $0x50] sm:$0xff]
    %v127 = vld [vmem:[#allocation5 + $0x58] sm:$0xff]
    %v128 = vld [vmem:[#allocation5 + $0x60] sm:$0xff]
    %v129 = vld [vmem:[#allocation5 + $0x68] sm:$0xff]
    %v130 = vld [vmem:[#allocation5 + $0x70] sm:$0xff]
    %v131 = vld [vmem:[#allocation5 + $0x78] sm:$0xff]
    %v132 = vld [vmem:[%s2] sm:$0x1]
    %v134 = vlaneseq
    %v135 = vshrl.u32 %v134, 7
    %v136 = vsub.s32 0, %v135
    %v137 = vrot.slane %v132, %v136
    %139 = vmatprep.subr.mxu0 0.0
    %140 = vmatpush1.msra.mxu0 %v116
    %141 = vmatprep.subr.mxu0 0.0
    %142 = vmatpush1.msra.mxu0 %v117
    %143 = vmatprep.subr.mxu0 0.0
    %144 = vmatpush1.msra.mxu0 %v118
    %145 = vmatprep.subr.mxu0 0.0
    %146 = vmatpush1.msra.mxu0 %v119
    %147 = vmatprep.subr.mxu0 0.0
    %148 = vmatpush1.msra.mxu0 %v120
    %149 = vmatprep.subr.mxu0 0.0
    %150 = vmatpush1.msra.mxu0 %v121
    %151 = vmatprep.subr.mxu0 0.0
    %152 = vmatpush1.msra.mxu0 %v122
    %153 = vmatprep.subr.mxu0 0.0
    %154 = vmatpush1.msra.mxu0 %v123
    %155 = vmatprep.subr.mxu0 0.0
    %156 = vmatpush1.msra.mxu0 %v124
    %157 = vmatprep.subr.mxu0 0.0
    %158 = vmatpush1.msra.mxu0 %v125
    %159 = vmatprep.subr.mxu0 0.0
    %160 = vmatpush1.msra.mxu0 %v126
    %161 = vmatprep.subr.mxu0 0.0
    %162 = vmatpush1.msra.mxu0 %v127
    %163 = vmatprep.subr.mxu0 0.0
    %164 = vmatpush1.msra.mxu0 %v128
    %165 = vmatprep.subr.mxu0 0.0
    %166 = vmatpush1.msra.mxu0 %v129
    %167 = vmatprep.subr.mxu0 0.0
    %168 = vmatpush1.msra.mxu0 %v130
    %169 = vmatprep.subr.mxu0 0.0
    %170 = vmatpush1.msra.mxu0 %v131
    %171 = vmatprep.subr.mxu0 0.0
    %172 = vmatpush1.msra.mxu0 0.0
    %173 = vmatprep.subr.mxu0 0.0
    %174 = vmatpush1.msra.mxu0 0.0
    %175 = vmatprep.subr.mxu0 0.0
    %176 = vmatpush1.msra.mxu0 0.0
    %177 = vmatprep.subr.mxu0 0.0
    %178 = vmatpush1.msra.mxu0 0.0
    %179 = vmatprep.subr.mxu0 0.0
    %180 = vmatpush1.msra.mxu0 0.0
    %181 = vmatprep.subr.mxu0 0.0
    %182 = vmatpush1.msra.mxu0 0.0
    %183 = vmatprep.subr.mxu0 0.0
    %184 = vmatpush1.msra.mxu0 0.0
    %185 = vmatprep.subr.mxu0 0.0
    %186 = vmatpush1.msra.mxu0 0.0
    %187 = vmatprep.subr.mxu0 0.0
    %188 = vmatpush1.msra.mxu0 0.0
    %189 = vmatprep.subr.mxu0 0.0
    %190 = vmatpush1.msra.mxu0 0.0
    %191 = vmatprep.subr.mxu0 0.0
    %192 = vmatpush1.msra.mxu0 0.0
    %193 = vmatprep.subr.mxu0 0.0
    %194 = vmatpush1.msra.mxu0 0.0
    %195 = vmatprep.subr.mxu0 0.0
    %196 = vmatpush1.msra.mxu0 0.0
    %197 = vmatprep.subr.mxu0 0.0
    %198 = vmatpush1.msra.mxu0 0.0
    %199 = vmatprep.subr.mxu0 0.0
    %200 = vmatpush1.msra.mxu0 0.0
    %201 = vmatprep.subr.mxu0 0.0
    %202 = vmatpush1.msra.mxu0 0.0
    %203 = vmatprep.mubr.f32.mxu0 0.0
    %204 = vmatmul.mubr.f32.gmra.mrb[0].mxu0 %v104
    %v205 = vpop.f32.mrb[0].mxu0
    %v206 = vadd.f32 %v137, %v205
    %v207 = vpop.f32.mrb[0].mxu0
    %208 = vmatprep.mubr.f32.mxu0 0.0
    %209 = vmatmul.mubr.f32.gmra.mrb[0].mxu0 %v105
    %v210 = vpop.f32.mrb[0].mxu0
    %v211 = vadd.f32 %v137, %v210
    %v212 = vpop.f32.mrb[0].mxu0
    %213 = vmatprep.mubr.f32.mxu0 0.0
    %214 = vmatmul.mubr.f32.gmra.mrb[0].mxu0 %v106
    %v215 = vpop.f32.mrb[0].mxu0
    %v216 = vadd.f32 %v137, %v215
    %v217 = vpop.f32.mrb[0].mxu0
    %218 = vmatprep.mubr.f32.mxu0 0.0
    %219 = vmatmul.mubr.f32.gmra.mrb[0].mxu0 %v107
    %v220 = vpop.f32.mrb[0].mxu0
    %v221 = vadd.f32 %v137, %v220
    %v222 = vpop.f32.mrb[0].mxu0
    %223 = vmatprep.mubr.f32.mxu0 0.0
    %224 = vmatmul.mubr.f32.gmra.mrb[0].mxu0 %v108
    %v225 = vpop.f32.mrb[0].mxu0
    %v226 = vadd.f32 %v137, %v225
    %v227 = vpop.f32.mrb[0].mxu0
    %228 = vmatprep.mubr.f32.mxu0 0.0
    %229 = vmatmul.mubr.f32.gmra.mrb[0].mxu0 %v109
    %v230 = vpop.f32.mrb[0].mxu0
    %v231 = vadd.f32 %v137, %v230
    %v232 = vpop.f32.mrb[0].mxu0
    %233 = vmatprep.mubr.f32.mxu0 0.0
    %234 = vmatmul.mubr.f32.gmra.mrb[0].mxu0 %v110
    %v235 = vpop.f32.mrb[0].mxu0
    %v236 = vadd.f32 %v137, %v235
    %v237 = vpop.f32.mrb[0].mxu0
    %238 = vmatprep.mubr.f32.mxu0 0.0
    %239 = vmatmul.mubr.f32.gmra.mrb[0].mxu0 %v111
    %v240 = vpop.f32.mrb[0].mxu0
    %v241 = vadd.f32 %v137, %v240
    %v242 = vpop.f32.mrb[0].mxu0
    %243 = vmatprep.mubr.f32.mxu0 0.0
    %244 = vmatmul.mubr.f32.gmra.mrb[0].mxu0 %v112
    %v245 = vpop.f32.mrb[0].mxu0
    %v246 = vadd.f32 %v137, %v245
    %v247 = vpop.f32.mrb[0].mxu0
    %248 = vmatprep.mubr.f32.mxu0 0.0
    %249 = vmatmul.mubr.f32.gmra.mrb[0].mxu0 %v113
    %v250 = vpop.f32.mrb[0].mxu0
    %v251 = vadd.f32 %v137, %v250
    %v252 = vpop.f32.mrb[0].mxu0
    %253 = vmatprep.mubr.f32.mxu0 0.0
    %254 = vmatmul.mubr.f32.gmra.mrb[0].mxu0 %v114
    %v255 = vpop.f32.mrb[0].mxu0
    %v256 = vadd.f32 %v137, %v255
    %v257 = vpop.f32.mrb[0].mxu0
    %258 = vmatprep.mubr.f32.mxu0 0.0
    %259 = vmatmul.mubr.f32.gmra.mrb[0].mxu0 %v115
    %v260 = vpop.f32.mrb[0].mxu0
    %v261 = vadd.f32 %v137, %v260
    %v262 = vpop.f32.mrb[0].mxu0
    %263 = vdwg.mxu0
    %v264 = vmax.f32 %v206, 0.0
    %v265 = vmax.f32 %v211, 0.0
    %v266 = vmax.f32 %v216, 0.0
    %v267 = vmax.f32 %v221, 0.0
    %v268 = vmax.f32 %v226, 0.0
    %v269 = vmax.f32 %v231, 0.0
    %v270 = vmax.f32 %v236, 0.0
    %v271 = vmax.f32 %v241, 0.0
    %v272 = vmax.f32 %v246, 0.0
    %v273 = vmax.f32 %v251, 0.0
    %v274 = vmax.f32 %v256, 0.0
    %v275 = vmax.f32 %v261, 0.0
    %v276 = vld [vmem:[#allocation7] sm:$0xff]
    %v277 = vld [vmem:[#allocation7 + $0x8] sm:$0xff]
    %v278 = vld [vmem:[#allocation7 + $0x10] sm:$0xff]
    %v279 = vld [vmem:[#allocation7 + $0x18] sm:$0xff]
    %v280 = vld [vmem:[#allocation7 + $0x20] sm:$0xff]
    %v281 = vld [vmem:[#allocation7 + $0x28] sm:$0xff]
    %v282 = vld [vmem:[#allocation7 + $0x30] sm:$0xff]
    %v283 = vld [vmem:[#allocation7 + $0x38] sm:$0xff]
    %v284 = vld [vmem:[#allocation7 + $0x40] sm:$0xff]
    %v285 = vld [vmem:[#allocation7 + $0x48] sm:$0xff]
    %v286 = vld [vmem:[#allocation7 + $0x50] sm:$0xff]
    %v287 = vld [vmem:[#allocation7 + $0x58] sm:$0xff]
    %v288 = vld [vmem:[#allocation7 + $0x60] sm:$0xff]
    %v289 = vld [vmem:[#allocation7 + $0x68] sm:$0xff]
    %v290 = vld [vmem:[#allocation7 + $0x70] sm:$0xff]
    %v291 = vld [vmem:[#allocation7 + $0x78] sm:$0xff]
    %v292 = vld [vmem:[%s4] sm:$0x1]
    %v294 = vlaneseq
    %v295 = vshrl.u32 %v294, 7
    %v296 = vsub.s32 0, %v295
    %v297 = vrot.slane %v292, %v296
    %299 = vmatprep.subr.mxu0 0.0
    %300 = vmatpush1.msra.mxu0 %v276
    %301 = vmatprep.subr.mxu0 0.0
    %302 = vmatpush1.msra.mxu0 %v277
    %303 = vmatprep.subr.mxu0 0.0
    %304 = vmatpush1.msra.mxu0 %v278
    %305 = vmatprep.subr.mxu0 0.0
    %306 = vmatpush1.msra.mxu0 %v279
    %307 = vmatprep.subr.mxu0 0.0
    %308 = vmatpush1.msra.mxu0 %v280
    %309 = vmatprep.subr.mxu0 0.0
    %310 = vmatpush1.msra.mxu0 %v281
    %311 = vmatprep.subr.mxu0 0.0
    %312 = vmatpush1.msra.mxu0 %v282
    %313 = vmatprep.subr.mxu0 0.0
    %314 = vmatpush1.msra.mxu0 %v283
    %315 = vmatprep.subr.mxu0 0.0
    %316 = vmatpush1.msra.mxu0 %v284
    %317 = vmatprep.subr.mxu0 0.0
    %318 = vmatpush1.msra.mxu0 %v285
    %319 = vmatprep.subr.mxu0 0.0
    %320 = vmatpush1.msra.mxu0 %v286
    %321 = vmatprep.subr.mxu0 0.0
    %322 = vmatpush1.msra.mxu0 %v287
    %323 = vmatprep.subr.mxu0 0.0
    %324 = vmatpush1.msra.mxu0 %v288
    %325 = vmatprep.subr.mxu0 0.0
    %326 = vmatpush1.msra.mxu0 %v289
    %327 = vmatprep.subr.mxu0 0.0
    %328 = vmatpush1.msra.mxu0 %v290
    %329 = vmatprep.subr.mxu0 0.0
    %330 = vmatpush1.msra.mxu0 %v291
    %331 = vmatprep.subr.mxu0 0.0
    %332 = vmatpush1.msra.mxu0 0.0
    %333 = vmatprep.subr.mxu0 0.0
    %334 = vmatpush1.msra.mxu0 0.0
    %335 = vmatprep.subr.mxu0 0.0
    %336 = vmatpush1.msra.mxu0 0.0
    %337 = vmatprep.subr.mxu0 0.0
    %338 = vmatpush1.msra.mxu0 0.0
    %339 = vmatprep.subr.mxu0 0.0
    %340 = vmatpush1.msra.mxu0 0.0
    %341 = vmatprep.subr.mxu0 0.0
    %342 = vmatpush1.msra.mxu0 0.0
    %343 = vmatprep.subr.mxu0 0.0
    %344 = vmatpush1.msra.mxu0 0.0
    %345 = vmatprep.subr.mxu0 0.0
    %346 = vmatpush1.msra.mxu0 0.0
    %347 = vmatprep.subr.mxu0 0.0
    %348 = vmatpush1.msra.mxu0 0.0
    %349 = vmatprep.subr.mxu0 0.0
    %350 = vmatpush1.msra.mxu0 0.0
    %351 = vmatprep.subr.mxu0 0.0
    %352 = vmatpush1.msra.mxu0 0.0
    %353 = vmatprep.subr.mxu0 0.0
    %354 = vmatpush1.msra.mxu0 0.0
    %355 = vmatprep.subr.mxu0 0.0
    %356 = vmatpush1.msra.mxu0 0.0
    %357 = vmatprep.subr.mxu0 0.0
    %358 = vmatpush1.msra.mxu0 0.0
    %359 = vmatprep.subr.mxu0 0.0
    %360 = vmatpush1.msra.mxu0 0.0
    %361 = vmatprep.subr.mxu0 0.0
    %362 = vmatpush1.msra.mxu0 0.0
    %363 = vmatprep.mubr.f32.mxu0 0.0
    %364 = vmatmul.mubr.f32.gmra.mrb[0].mxu0 %v264
    %v365 = vpop.f32.mrb[0].mxu0
    %v366 = vadd.f32 %v297, %v365
    %v367 = vpop.f32.mrb[0].mxu0
    %368 = vmatprep.mubr.f32.mxu0 0.0
    %369 = vmatmul.mubr.f32.gmra.mrb[0].mxu0 %v265
    %v370 = vpop.f32.mrb[0].mxu0
    %v371 = vadd.f32 %v297, %v370
    %v372 = vpop.f32.mrb[0].mxu0
    %373 = vmatprep.mubr.f32.mxu0 0.0
    %374 = vmatmul.mubr.f32.gmra.mrb[0].mxu0 %v266
    %v375 = vpop.f32.mrb[0].mxu0
    %v376 = vadd.f32 %v297, %v375
    %v377 = vpop.f32.mrb[0].mxu0
    %378 = vmatprep.mubr.f32.mxu0 0.0
    %379 = vmatmul.mubr.f32.gmra.mrb[0].mxu0 %v267
    %v380 = vpop.f32.mrb[0].mxu0
    %v381 = vadd.f32 %v297, %v380
    %v382 = vpop.f32.mrb[0].mxu0
    %383 = vmatprep.mubr.f32.mxu0 0.0
    %384 = vmatmul.mubr.f32.gmra.mrb[0].mxu0 %v268
    %v385 = vpop.f32.mrb[0].mxu0
    %v386 = vadd.f32 %v297, %v385
    %v387 = vpop.f32.mrb[0].mxu0
    %388 = vmatprep.mubr.f32.mxu0 0.0
    %389 = vmatmul.mubr.f32.gmra.mrb[0].mxu0 %v269
    %v390 = vpop.f32.mrb[0].mxu0
    %v391 = vadd.f32 %v297, %v390
    %v392 = vpop.f32.mrb[0].mxu0
    %393 = vmatprep.mubr.f32.mxu0 0.0
    %394 = vmatmul.mubr.f32.gmra.mrb[0].mxu0 %v270
    %v395 = vpop.f32.mrb[0].mxu0
    %v396 = vadd.f32 %v297, %v395
    %v397 = vpop.f32.mrb[0].mxu0
    %398 = vmatprep.mubr.f32.mxu0 0.0
    %399 = vmatmul.mubr.f32.gmra.mrb[0].mxu0 %v271
    %v400 = vpop.f32.mrb[0].mxu0
    %v401 = vadd.f32 %v297, %v400
    %v402 = vpop.f32.mrb[0].mxu0
    %403 = vmatprep.mubr.f32.mxu0 0.0
    %404 = vmatmul.mubr.f32.gmra.mrb[0].mxu0 %v272
    %v405 = vpop.f32.mrb[0].mxu0
    %v406 = vadd.f32 %v297, %v405
    %v407 = vpop.f32.mrb[0].mxu0
    %408 = vmatprep.mubr.f32.mxu0 0.0
    %409 = vmatmul.mubr.f32.gmra.mrb[0].mxu0 %v273
    %v410 = vpop.f32.mrb[0].mxu0
    %v411 = vadd.f32 %v297, %v410
    %v412 = vpop.f32.mrb[0].mxu0
    %413 = vmatprep.mubr.f32.mxu0 0.0
    %414 = vmatmul.mubr.f32.gmra.mrb[0].mxu0 %v274
    %v415 = vpop.f32.mrb[0].mxu0
    %v416 = vadd.f32 %v297, %v415
    %v417 = vpop.f32.mrb[0].mxu0
    %418 = vmatprep.mubr.f32.mxu0 0.0
    %419 = vmatmul.mubr.f32.gmra.mrb[0].mxu0 %v275
    %v420 = vpop.f32.mrb[0].mxu0
    %v421 = vadd.f32 %v297, %v420
    %v422 = vpop.f32.mrb[0].mxu0
    %423 = vdwg.mxu0
    %v424 = vmax.f32 %v366, 0.0
    %v425 = vmax.f32 %v371, 0.0
    %v426 = vmax.f32 %v376, 0.0
    %v427 = vmax.f32 %v381, 0.0
    %v428 = vmax.f32 %v386, 0.0
    %v429 = vmax.f32 %v391, 0.0
    %v430 = vmax.f32 %v396, 0.0
    %v431 = vmax.f32 %v401, 0.0
    %v432 = vmax.f32 %v406, 0.0
    %v433 = vmax.f32 %v411, 0.0
    %v434 = vmax.f32 %v416, 0.0
    %v435 = vmax.f32 %v421, 0.0
    %v436 = vld [vmem:[#allocation8] sm:$0xff]
    %v437 = vld [vmem:[#allocation8 + $0x8] sm:$0xff]
    %v438 = vld [vmem:[#allocation8 + $0x10] sm:$0xff]
    %v439 = vld [vmem:[#allocation8 + $0x18] sm:$0xff]
    %v440 = vld [vmem:[#allocation8 + $0x20] sm:$0xff]
    %v441 = vld [vmem:[#allocation8 + $0x28] sm:$0xff]
    %v442 = vld [vmem:[#allocation8 + $0x30] sm:$0xff]
    %v443 = vld [vmem:[#allocation8 + $0x38] sm:$0xff]
    %v444 = vld [vmem:[#allocation8 + $0x40] sm:$0xff]
    %v445 = vld [vmem:[#allocation8 + $0x48] sm:$0xff]
    %v446 = vld [vmem:[#allocation8 + $0x50] sm:$0xff]
    %v447 = vld [vmem:[#allocation8 + $0x58] sm:$0xff]
    %v448 = vld [vmem:[#allocation8 + $0x60] sm:$0xff]
    %v449 = vld [vmem:[#allocation8 + $0x68] sm:$0xff]
    %v450 = vld [vmem:[#allocation8 + $0x70] sm:$0xff]
    %v451 = vld [vmem:[#allocation8 + $0x78] sm:$0xff]
    %v452 = vld [vmem:[%s6] sm:$0x1]
    %v454 = vlaneseq
    %v455 = vshrl.u32 %v454, 7
    %v456 = vsub.s32 0, %v455
    %v457 = vrot.slane %v452, %v456
    %459 = vmatprep.subr.mxu0 0.0
    %460 = vmatpush1.msra.mxu0 %v436
    %461 = vmatprep.subr.mxu0 0.0
    %462 = vmatpush1.msra.mxu0 %v437
    %463 = vmatprep.subr.mxu0 0.0
    %464 = vmatpush1.msra.mxu0 %v438
    %465 = vmatprep.subr.mxu0 0.0
    %466 = vmatpush1.msra.mxu0 %v439
    %467 = vmatprep.subr.mxu0 0.0
    %468 = vmatpush1.msra.mxu0 %v440
    %469 = vmatprep.subr.mxu0 0.0
    %470 = vmatpush1.msra.mxu0 %v441
    %471 = vmatprep.subr.mxu0 0.0
    %472 = vmatpush1.msra.mxu0 %v442
    %473 = vmatprep.subr.mxu0 0.0
    %474 = vmatpush1.msra.mxu0 %v443
    %475 = vmatprep.subr.mxu0 0.0
    %476 = vmatpush1.msra.mxu0 %v444
    %477 = vmatprep.subr.mxu0 0.0
    %478 = vmatpush1.msra.mxu0 %v445
    %479 = vmatprep.subr.mxu0 0.0
    %480 = vmatpush1.msra.mxu0 %v446
    %481 = vmatprep.subr.mxu0 0.0
    %482 = vmatpush1.msra.mxu0 %v447
    %483 = vmatprep.subr.mxu0 0.0
    %484 = vmatpush1.msra.mxu0 %v448
    %485 = vmatprep.subr.mxu0 0.0
    %486 = vmatpush1.msra.mxu0 %v449
    %487 = vmatprep.subr.mxu0 0.0
    %488 = vmatpush1.msra.mxu0 %v450
    %489 = vmatprep.subr.mxu0 0.0
    %490 = vmatpush1.msra.mxu0 %v451
    %491 = vmatprep.subr.mxu0 0.0
    %492 = vmatpush1.msra.mxu0 0.0
    %493 = vmatprep.subr.mxu0 0.0
    %494 = vmatpush1.msra.mxu0 0.0
    %495 = vmatprep.subr.mxu0 0.0
    %496 = vmatpush1.msra.mxu0 0.0
    %497 = vmatprep.subr.mxu0 0.0
    %498 = vmatpush1.msra.mxu0 0.0
    %499 = vmatprep.subr.mxu0 0.0
    %500 = vmatpush1.msra.mxu0 0.0
    %501 = vmatprep.subr.mxu0 0.0
    %502 = vmatpush1.msra.mxu0 0.0
    %503 = vmatprep.subr.mxu0 0.0
    %504 = vmatpush1.msra.mxu0 0.0
    %505 = vmatprep.subr.mxu0 0.0
    %506 = vmatpush1.msra.mxu0 0.0
    %507 = vmatprep.subr.mxu0 0.0
    %508 = vmatpush1.msra.mxu0 0.0
    %509 = vmatprep.subr.mxu0 0.0
    %510 = vmatpush1.msra.mxu0 0.0
    %511 = vmatprep.subr.mxu0 0.0
    %512 = vmatpush1.msra.mxu0 0.0
    %513 = vmatprep.subr.mxu0 0.0
    %514 = vmatpush1.msra.mxu0 0.0
    %515 = vmatprep.subr.mxu0 0.0
    %516 = vmatpush1.msra.mxu0 0.0
    %517 = vmatprep.subr.mxu0 0.0
    %518 = vmatpush1.msra.mxu0 0.0
    %519 = vmatprep.subr.mxu0 0.0
    %520 = vmatpush1.msra.mxu0 0.0
    %521 = vmatprep.subr.mxu0 0.0
    %522 = vmatpush1.msra.mxu0 0.0
    %523 = vmatprep.mubr.f32.mxu0 0.0
    %524 = vmatmul.mubr.f32.gmra.mrb[0].mxu0 %v424
    %v525 = vpop.f32.mrb[0].mxu0
    %v526 = vadd.f32 %v457, %v525
    %v527 = vpop.f32.mrb[0].mxu0
    %528 = vmatprep.mubr.f32.mxu0 0.0
    %529 = vmatmul.mubr.f32.gmra.mrb[0].mxu0 %v425
    %v530 = vpop.f32.mrb[0].mxu0
    %v531 = vadd.f32 %v457, %v530
    %v532 = vpop.f32.mrb[0].mxu0
    %533 = vmatprep.mubr.f32.mxu0 0.0
    %534 = vmatmul.mubr.f32.gmra.mrb[0].mxu0 %v426
    %v535 = vpop.f32.mrb[0].mxu0
    %v536 = vadd.f32 %v457, %v535
    %v537 = vpop.f32.mrb[0].mxu0
    %538 = vmatprep.mubr.f32.mxu0 0.0
    %539 = vmatmul.mubr.f32.gmra.mrb[0].mxu0 %v427
    %v540 = vpop.f32.mrb[0].mxu0
    %v541 = vadd.f32 %v457, %v540
    %v542 = vpop.f32.mrb[0].mxu0
    %543 = vmatprep.mubr.f32.mxu0 0.0
    %544 = vmatmul.mubr.f32.gmra.mrb[0].mxu0 %v428
    %v545 = vpop.f32.mrb[0].mxu0
    %v546 = vadd.f32 %v457, %v545
    %v547 = vpop.f32.mrb[0].mxu0
    %548 = vmatprep.mubr.f32.mxu0 0.0
    %549 = vmatmul.mubr.f32.gmra.mrb[0].mxu0 %v429
    %v550 = vpop.f32.mrb[0].mxu0
    %v551 = vadd.f32 %v457, %v550
    %v552 = vpop.f32.mrb[0].mxu0
    %553 = vmatprep.mubr.f32.mxu0 0.0
    %554 = vmatmul.mubr.f32.gmra.mrb[0].mxu0 %v430
    %v555 = vpop.f32.mrb[0].mxu0
    %v556 = vadd.f32 %v457, %v555
    %v557 = vpop.f32.mrb[0].mxu0
    %558 = vmatprep.mubr.f32.mxu0 0.0
    %559 = vmatmul.mubr.f32.gmra.mrb[0].mxu0 %v431
    %v560 = vpop.f32.mrb[0].mxu0
    %v561 = vadd.f32 %v457, %v560
    %v562 = vpop.f32.mrb[0].mxu0
    %563 = vmatprep.mubr.f32.mxu0 0.0
    %564 = vmatmul.mubr.f32.gmra.mrb[0].mxu0 %v432
    %v565 = vpop.f32.mrb[0].mxu0
    %v566 = vadd.f32 %v457, %v565
    %v567 = vpop.f32.mrb[0].mxu0
    %568 = vmatprep.mubr.f32.mxu0 0.0
    %569 = vmatmul.mubr.f32.gmra.mrb[0].mxu0 %v433
    %v570 = vpop.f32.mrb[0].mxu0
    %v571 = vadd.f32 %v457, %v570
    %v572 = vpop.f32.mrb[0].mxu0
    %573 = vmatprep.mubr.f32.mxu0 0.0
    %574 = vmatmul.mubr.f32.gmra.mrb[0].mxu0 %v434
    %v575 = vpop.f32.mrb[0].mxu0
    %v576 = vadd.f32 %v457, %v575
    %v577 = vpop.f32.mrb[0].mxu0
    %578 = vmatprep.mubr.f32.mxu0 0.0
    %579 = vmatmul.mubr.f32.gmra.mrb[0].mxu0 %v435
    %v580 = vpop.f32.mrb[0].mxu0
    %v581 = vadd.f32 %v457, %v580
    %v582 = vpop.f32.mrb[0].mxu0
    %583 = vdwg.mxu0
    %v584 = vld [vmem:[#allocation10] sm:$0xff]
    %v585 = vld [vmem:[#allocation10 + $0x8] sm:$0xff]
    %v586 = vld [vmem:[#allocation10 + $0x10] sm:$0xff]
    %v587 = vld [vmem:[#allocation10 + $0x18] sm:$0xff]
    %v588 = vld [vmem:[#allocation10 + $0x20] sm:$0xff]
    %v589 = vld [vmem:[#allocation10 + $0x28] sm:$0xff]
    %vm590 = vcmask 785408
    %v592 = vsel %vm590, %v584, 0
    %v595 = vsel %vm590, %v585, 0
    %v598 = vsel %vm590, %v586, 0
    %v601 = vsel %vm590, %v587, 0
    %v604 = vsel %vm590, %v588, 0
    %v607 = vsel %vm590, %v589, 0
    %609 = vmatprep.subr.mxu0 0.0
    %610 = vmatpush1.msra.mxu0 %v526
    %611 = vmatprep.subr.mxu0 0.0
    %612 = vmatpush1.msra.mxu0 %v531
    %613 = vmatprep.subr.mxu0 0.0
    %614 = vmatpush1.msra.mxu0 %v536
    %615 = vmatprep.subr.mxu0 0.0
    %616 = vmatpush1.msra.mxu0 %v541
    %617 = vmatprep.subr.mxu0 0.0
    %618 = vmatpush1.msra.mxu0 %v546
    %619 = vmatprep.subr.mxu0 0.0
    %620 = vmatpush1.msra.mxu0 %v551
    %621 = vmatprep.subr.mxu0 0.0
    %622 = vmatpush1.msra.mxu0 %v556
    %623 = vmatprep.subr.mxu0 0.0
    %624 = vmatpush1.msra.mxu0 %v561
    %625 = vmatprep.subr.mxu0 0.0
    %626 = vmatpush1.msra.mxu0 %v566
    %627 = vmatprep.subr.mxu0 0.0
    %628 = vmatpush1.msra.mxu0 %v571
    %629 = vmatprep.subr.mxu0 0.0
    %630 = vmatpush1.msra.mxu0 %v576
    %631 = vmatprep.subr.mxu0 0.0
    %632 = vmatpush1.msra.mxu0 %v581
    %633 = vmatprep.subr.mxu0 0.0
    %634 = vmatpush1.msra.mxu0 0.0
    %635 = vmatprep.subr.mxu0 0.0
    %636 = vmatpush1.msra.mxu0 0.0
    %637 = vmatprep.subr.mxu0 0.0
    %638 = vmatpush1.msra.mxu0 0.0
    %639 = vmatprep.subr.mxu0 0.0
    %640 = vmatpush1.msra.mxu0 0.0
    %641 = vmatprep.subr.mxu0 0.0
    %642 = vmatpush1.msra.mxu0 0.0
    %643 = vmatprep.subr.mxu0 0.0
    %644 = vmatpush1.msra.mxu0 0.0
    %645 = vmatprep.subr.mxu0 0.0
    %646 = vmatpush1.msra.mxu0 0.0
    %647 = vmatprep.subr.mxu0 0.0
    %648 = vmatpush1.msra.mxu0 0.0
    %649 = vmatprep.subr.mxu0 0.0
    %650 = vmatpush1.msra.mxu0 0.0
    %651 = vmatprep.subr.mxu0 0.0
    %652 = vmatpush1.msra.mxu0 0.0
    %653 = vmatprep.subr.mxu0 0.0
    %654 = vmatpush1.msra.mxu0 0.0
    %655 = vmatprep.subr.mxu0 0.0
    %656 = vmatpush1.msra.mxu0 0.0
    %657 = vmatprep.subr.mxu0 0.0
    %658 = vmatpush1.msra.mxu0 0.0
    %659 = vmatprep.subr.mxu0 0.0
    %660 = vmatpush1.msra.mxu0 0.0
    %661 = vmatprep.subr.mxu0 0.0
    %662 = vmatpush1.msra.mxu0 0.0
    %663 = vmatprep.subr.mxu0 0.0
    %664 = vmatpush1.msra.mxu0 0.0
    %665 = vmatprep.subr.mxu0 0.0
    %666 = vmatpush1.msra.mxu0 0.0
    %667 = vmatprep.subr.mxu0 0.0
    %668 = vmatpush1.msra.mxu0 0.0
    %669 = vmatprep.subr.mxu0 0.0
    %670 = vmatpush1.msra.mxu0 0.0
    %671 = vmatprep.subr.mxu0 0.0
    %672 = vmatpush1.msra.mxu0 0.0
    %673 = vmatprep.mubr.f32.mxu0 0.0
    %674 = vmatmul.mubr.f32.gmra.mrb[0].mxu0 %v592
    %v675 = vpop.f32.mrb[0].mxu0
    %v676 = vadd.f32 0.0, %v675
    %v677 = vpop.f32.mrb[0].mxu0
    %678 = vmatprep.mubr.f32.mxu0 0.0
    %679 = vmatmul.mubr.f32.gmra.mrb[0].mxu0 %v595
    %v680 = vpop.f32.mrb[0].mxu0
    %v681 = vadd.f32 0.0, %v680
    %v682 = vpop.f32.mrb[0].mxu0
    %683 = vmatprep.mubr.f32.mxu0 0.0
    %684 = vmatmul.mubr.f32.gmra.mrb[0].mxu0 %v598
    %v685 = vpop.f32.mrb[0].mxu0
    %v686 = vadd.f32 0.0, %v685
    %v687 = vpop.f32.mrb[0].mxu0
    %688 = vmatprep.mubr.f32.mxu0 0.0
    %689 = vmatmul.mubr.f32.gmra.mrb[0].mxu0 %v601
    %v690 = vpop.f32.mrb[0].mxu0
    %v691 = vadd.f32 0.0, %v690
    %v692 = vpop.f32.mrb[0].mxu0
    %693 = vmatprep.mubr.f32.mxu0 0.0
    %694 = vmatmul.mubr.f32.gmra.mrb[0].mxu0 %v604
    %v695 = vpop.f32.mrb[0].mxu0
    %v696 = vadd.f32 0.0, %v695
    %v697 = vpop.f32.mrb[0].mxu0
    %698 = vmatprep.mubr.f32.mxu0 0.0
    %699 = vmatmul.mubr.f32.gmra.mrb[0].mxu0 %v607
    %v700 = vpop.f32.mrb[0].mxu0
    %v701 = vadd.f32 0.0, %v700
    %v702 = vpop.f32.mrb[0].mxu0
    %703 = vdwg.mxu0
    %704 = vst [vmem:[#allocation11] sm:$0xff] %v676
    %705 = vst [vmem:[#allocation11 + $0x8] sm:$0xff] %v681
    %706 = vst [vmem:[#allocation11 + $0x10] sm:$0xff] %v686
    %707 = vst [vmem:[#allocation11 + $0x18] sm:$0xff] %v691
    %708 = vst [vmem:[#allocation11 + $0x20] sm:$0xff] %v696
    %709 = vst [vmem:[#allocation11 + $0x28] sm:$0xff] %v701
    %v710 = vld [vmem:[%s8] sm:$0xff]
    %v711 = vld [vmem:[%s8 + $0x8] sm:$0xff]
    %v712 = vld [vmem:[%s8 + $0x10] sm:$0xff]
    %v714 = vsel %vm590, %v710, 0
    %v717 = vsel %vm590, %v711, 0
    %v720 = vsel %vm590, %v712, 0
    %722 = vmatprep.subr.mxu0 0.0
    %723 = vmatpush1.msra.mxu0 %v526
    %724 = vmatprep.subr.mxu0 0.0
    %725 = vmatpush1.msra.mxu0 %v531
    %726 = vmatprep.subr.mxu0 0.0
    %727 = vmatpush1.msra.mxu0 %v536
    %728 = vmatprep.subr.mxu0 0.0
    %729 = vmatpush1.msra.mxu0 %v541
    %730 = vmatprep.subr.mxu0 0.0
    %731 = vmatpush1.msra.mxu0 %v546
    %732 = vmatprep.subr.mxu0 0.0
    %733 = vmatpush1.msra.mxu0 %v551
    %734 = vmatprep.subr.mxu0 0.0
    %735 = vmatpush1.msra.mxu0 %v556
    %736 = vmatprep.subr.mxu0 0.0
    %737 = vmatpush1.msra.mxu0 %v561
    %738 = vmatprep.subr.mxu0 0.0
    %739 = vmatpush1.msra.mxu0 %v566
    %740 = vmatprep.subr.mxu0 0.0
    %741 = vmatpush1.msra.mxu0 %v571
    %742 = vmatprep.subr.mxu0 0.0
    %743 = vmatpush1.msra.mxu0 %v576
    %744 = vmatprep.subr.mxu0 0.0
    %745 = vmatpush1.msra.mxu0 %v581
    %746 = vmatprep.subr.mxu0 0.0
    %747 = vmatpush1.msra.mxu0 0.0
    %748 = vmatprep.subr.mxu0 0.0
    %749 = vmatpush1.msra.mxu0 0.0
    %750 = vmatprep.subr.mxu0 0.0
    %751 = vmatpush1.msra.mxu0 0.0
    %752 = vmatprep.subr.mxu0 0.0
    %753 = vmatpush1.msra.mxu0 0.0
    %754 = vmatprep.subr.mxu0 0.0
    %755 = vmatpush1.msra.mxu0 0.0
    %756 = vmatprep.subr.mxu0 0.0
    %757 = vmatpush1.msra.mxu0 0.0
    %758 = vmatprep.subr.mxu0 0.0
    %759 = vmatpush1.msra.mxu0 0.0
    %760 = vmatprep.subr.mxu0 0.0
    %761 = vmatpush1.msra.mxu0 0.0
    %762 = vmatprep.subr.mxu0 0.0
    %763 = vmatpush1.msra.mxu0 0.0
    %764 = vmatprep.subr.mxu0 0.0
    %765 = vmatpush1.msra.mxu0 0.0
    %766 = vmatprep.subr.mxu0 0.0
    %767 = vmatpush1.msra.mxu0 0.0
    %768 = vmatprep.subr.mxu0 0.0
    %769 = vmatpush1.msra.mxu0 0.0
    %770 = vmatprep.subr.mxu0 0.0
    %771 = vmatpush1.msra.mxu0 0.0
    %772 = vmatprep.subr.mxu0 0.0
    %773 = vmatpush1.msra.mxu0 0.0
    %774 = vmatprep.subr.mxu0 0.0
    %775 = vmatpush1.msra.mxu0 0.0
    %776 = vmatprep.subr.mxu0 0.0
    %777 = vmatpush1.msra.mxu0 0.0
    %778 = vmatprep.subr.mxu0 0.0
    %779 = vmatpush1.msra.mxu0 0.0
    %780 = vmatprep.subr.mxu0 0.0
    %781 = vmatpush1.msra.mxu0 0.0
    %782 = vmatprep.subr.mxu0 0.0
    %783 = vmatpush1.msra.mxu0 0.0
    %784 = vmatprep.subr.mxu0 0.0
    %785 = vmatpush1.msra.mxu0 0.0
    %786 = vmatprep.mubr.f32.mxu0 0.0
    %787 = vmatmul.mubr.f32.gmra.mrb[0].mxu0 %v714
    %v788 = vpop.f32.mrb[0].mxu0
    %v789 = vadd.f32 0.0, %v788
    %v790 = vpop.f32.mrb[0].mxu0
    %791 = vmatprep.mubr.f32.mxu0 0.0
    %792 = vmatmul.mubr.f32.gmra.mrb[0].mxu0 %v717
    %v793 = vpop.f32.mrb[0].mxu0
    %v794 = vadd.f32 0.0, %v793
    %v795 = vpop.f32.mrb[0].mxu0
    %796 = vmatprep.mubr.f32.mxu0 0.0
    %797 = vmatmul.mubr.f32.gmra.mrb[0].mxu0 %v720
    %v798 = vpop.f32.mrb[0].mxu0
    %v799 = vadd.f32 0.0, %v798
    %v800 = vpop.f32.mrb[0].mxu0
    %801 = vdwg.mxu0
    %802 = vst [vmem:[#allocation12] sm:$0xff] %v789
    %803 = vst [vmem:[#allocation12 + $0x8] sm:$0xff] %v794
    %804 = vst [vmem:[#allocation12 + $0x10] sm:$0xff] %v799
    // Predicated region
    $region58: #{tpu_custom_call.1} parent=1 // pred_check
      _
    $region59: #{tpu_custom_call.1} parent=1 // pred_check_branch
      %806 = sbr.rel (0) target = $region61
    $region60: #{tpu_custom_call.1} parent=1 // pred_region
      %s808 = ssub.s32 768, 768
      %809 = vsyncadd [#allocation4], %s808
      %s810 = sshll.u32 [#allocation11], 4
      %s811 = int_to_ptr.vmem [resolvable:$true] %s810
      %816 = dma.vmem_to_hbm [thread:$0]  %s811, 768, %s9, [#allocation4], 128, 128, 8
    $region61: #{tpu_custom_call.1} parent=1 // pred_fallthru
      _
    // Predicated region
    $region62: #{tpu_custom_call.1} parent=1 // pred_check
      _
    $region63: #{tpu_custom_call.1} parent=1 // pred_check_branch
      %818 = sbr.rel (0) target = $region65
    $region64: #{tpu_custom_call.1} parent=1 // pred_region
      %s820 = ssub.s32 384, 384
      %821 = vsyncadd [#allocation13], %s820
      %s822 = sshll.u32 [#allocation12], 4
      %s823 = int_to_ptr.vmem [resolvable:$true] %s822
      %828 = dma.vmem_to_hbm [thread:$0]  %s823, 384, %s10, [#allocation13], 128, 128, 8
    $region65: #{tpu_custom_call.1} parent=1 // pred_fallthru
      _
    // Predicated region
    $region66: #{tpu_custom_call.1} parent=1 // pred_check
      _
    $region67: #{tpu_custom_call.1} parent=1 // pred_check_branch
      %830 = sbr.rel (0) target = $region69
    $region68: #{tpu_custom_call.1} parent=1 // pred_region
      %831 = dma.done [#allocation4], 768
    $region69: #{tpu_custom_call.1} parent=1 // pred_fallthru
      _
    // Predicated region
    $region70: #{tpu_custom_call.1} parent=1 // pred_check
      _
    $region71: #{tpu_custom_call.1} parent=1 // pred_check_branch
      %833 = sbr.rel (0) target = $region73
    $region72: #{tpu_custom_call.1} parent=1 // pred_region
      %834 = dma.done [#allocation13], 384
    $region73: #{tpu_custom_call.1} parent=1 // pred_fallthru
      _
    %835 = vsyncpa [#allocation3], 1
    %836 = vsyncpa [#allocation6], 1
    %837 = vsyncpa [#allocation9], 1
    %838 = vsyncpa [#allocation4], 1
    %839 = vsyncpa [#allocation13], 1

</llo_original>
